<compile_context>
chip_gen: v5e
topology: v5e:2x2
jax: 0.10.0
libtpu: 0.0.40
codegen_flags: <defaults>
</compile_context>

<pallas_src>
import jax
import jax.numpy as jnp
from jax.experimental import pallas as pl
from jax.experimental.pallas import tpu as pltpu


# ----------------------------------------------------------------------------
# Kernel A: encoder (K-tiled over item_num) + latent head + decoder hidden
# ----------------------------------------------------------------------------
def encoder_kernel(x_ref, we0_ref, be0_ref,
                   we1m_ref, be1m_ref, we1v_ref, be1v_ref,
                   wd0_ref, bd0_ref,
                   mu_ref, logvar_ref, d_ref,
                   acc_ref, sumsq_ref):
    k = pl.program_id(1)

    @pl.when(k == 0)
    def _():
        acc_ref[...] = jnp.zeros_like(acc_ref)
        sumsq_ref[...] = jnp.zeros_like(sumsq_ref)

    # bf16 x bf16 -> f32 accumulate: native MXU path.  x is an implicit-
    # feedback (0/1 / small-count) matrix, exactly representable in bf16.
    x = x_ref[...]                                           # (bm, bk) bf16
    acc_ref[...] += jnp.dot(x, we0_ref[...],
                            preferred_element_type=jnp.float32)
    xf = x.astype(jnp.float32)
    sumsq_ref[...] += jnp.sum(xf * xf, axis=1, keepdims=True)

    @pl.when(k == pl.num_programs(1) - 1)
    def _():
        # F.normalize(x, p=2, dim=1) folded in as a per-row scale after the
        # matmul: clamp on the squared norm (1e-24) == clamp on the norm (1e-12).
        inv_norm = jax.lax.rsqrt(jnp.maximum(sumsq_ref[...], 1e-24))
        h1 = jnp.tanh(acc_ref[...] * inv_norm + be0_ref[...])

        # Tiny epilogue dots: keep f32 LHS/RHS for accuracy (run once per
        # batch tile, negligible cost).
        mu = (jnp.dot(h1, we1m_ref[...].astype(jnp.float32),
                      preferred_element_type=jnp.float32) + be1m_ref[...])
        logvar = (jnp.dot(h1, we1v_ref[...].astype(jnp.float32),
                          preferred_element_type=jnp.float32) + be1v_ref[...])
        mu_ref[...] = mu
        logvar_ref[...] = logvar

        # reparameterize (eval mode): z = mu
        d = jnp.tanh(jnp.dot(mu, wd0_ref[...].astype(jnp.float32),
                             preferred_element_type=jnp.float32) + bd0_ref[...])
        d_ref[...] = d.astype(d_ref.dtype)     # bf16 handoff to kernel B


# ----------------------------------------------------------------------------
# Kernel B: decoder output projection (N outer / batch inner grid)
# ----------------------------------------------------------------------------
def decoder_out_kernel(d_ref, wd1_ref, bd1_ref, out_ref):
    # bf16 x bf16 MXU matmul, f32 accumulate + bias.
    out_ref[...] = (jnp.dot(d_ref[...], wd1_ref[...],
                            preferred_element_type=jnp.float32)
                    + bd1_ref[...])


# ----------------------------------------------------------------------------
# Wrapper
# ----------------------------------------------------------------------------
def _round_up(n, m):
    return ((n + m - 1) // m) * m


def _pad_to(a, shape):
    widths = [(0, t - s) for s, t in zip(a.shape, shape)]
    if all(w == (0, 0) for w in widths):
        return a
    return jnp.pad(a, widths)


def _nbytes(a):
    return int(a.size) * a.dtype.itemsize


def multivae_forward(x, params, *, latent_dim,
                     block_b=128, block_k=1024, block_n=1024):
    """MultiVAE eval forward on TPU via two tiled Pallas kernels.

    Weights are stored pre-transposed as (in_dim, out_dim).  The big weight
    matrices (we0, wd1) and the input x are streamed/fed to the MXU as bf16;
    all elementwise math and the small epilogue dots stay f32.

    Defaults (block_b=128, block_k=block_n=1024) target production shapes
    (item_num ~20-40k, hidden=600, latent=200); they adapt down automatically
    for small problems.  On v5e keep block_b at 128; on v6e/v7x 256 also works.
    """
    we0, be0, we1, be1, wd0, bd0, wd1, bd1 = params
    B, item_num = x.shape
    hidden_dim = we0.shape[1]
    f32 = jnp.float32
    bf16 = jnp.bfloat16

    # Lane-dense padding of the hidden / latent dims (e.g. 600 -> 640,
    # 200 -> 256) keeps every tile and output a 128-multiple in the lane dim.
    Hp = _round_up(hidden_dim, 128)
    Lp = _round_up(latent_dim, 128)

    # Adaptive tile sizes: never larger than the (padded) problem dims.
    block_b = min(block_b, _round_up(B, 8))
    block_k = min(block_k, _round_up(item_num, 128))
    block_n = min(block_n, _round_up(item_num, 128))

    Bp = _round_up(B, block_b)
    Ik = _round_up(item_num, block_k)
    In = _round_up(item_num, block_n)

    # Split encoder head column-wise so mu / logvar are written directly to
    # lane-dense outputs (no in-kernel slicing across lane tiles).
    we1_mu, we1_lv = we1[:, :latent_dim], we1[:, latent_dim:]
    be1_mu, be1_lv = be1[:, :latent_dim], be1[:, latent_dim:]

    # Zero-pad (exact for the matmuls and the row norm).  x / we0 / wd1 are
    # cast to bf16 for the MXU; x is binary/count data so bf16 is exact.
    xp = _pad_to(x, (Bp, Ik)).astype(bf16)
    we0p = _pad_to(we0, (Ik, Hp)).astype(bf16)
    be0p = _pad_to(be0.astype(f32), (1, Hp))
    we1m = _pad_to(we1_mu, (Hp, Lp))
    be1m = _pad_to(be1_mu.astype(f32), (1, Lp))
    we1v = _pad_to(we1_lv, (Hp, Lp))
    be1v = _pad_to(be1_lv.astype(f32), (1, Lp))
    wd0p = _pad_to(wd0, (Lp, Hp))
    bd0p = _pad_to(bd0.astype(f32), (1, Hp))
    wd1p = _pad_to(wd1, (Hp, In)).astype(bf16)
    bd1p = _pad_to(bd1.astype(f32), (1, In))

    n_btiles = Bp // block_b
    n_ntiles = In // block_n
    vmem_limit = 48 * 1024 * 1024   # fits v7x's 64 MiB with headroom

    # ---------------- kernel A: encoder + latent + decoder hidden -----------
    cost_a = pl.CostEstimate(
        flops=2 * Bp * (Ik * Hp + 2 * Hp * Lp + Lp * Hp),
        transcendentals=2 * Bp * Hp,
        bytes_accessed=int(
            _nbytes(xp)
            + n_btiles * (_nbytes(we0p) + _nbytes(we1m) + _nbytes(we1v)
                          + _nbytes(wd0p))
            + _nbytes(be0p) + _nbytes(be1m) + _nbytes(be1v) + _nbytes(bd0p)
            + Bp * (2 * Lp * 4 + Hp * 2)))

    mu_p, logvar_p, d_p = pl.pallas_call(
        encoder_kernel,
        out_shape=(
            jax.ShapeDtypeStruct((Bp, Lp), f32),    # mu
            jax.ShapeDtypeStruct((Bp, Lp), f32),    # logvar
            jax.ShapeDtypeStruct((Bp, Hp), bf16),   # decoder hidden (bf16 handoff)
        ),
        grid=(Bp // block_b, Ik // block_k),
        in_specs=[
            pl.BlockSpec((block_b, block_k), lambda i, k: (i, k)),   # x
            pl.BlockSpec((block_k, Hp), lambda i, k: (k, 0)),        # we0
            pl.BlockSpec((1, Hp), lambda i, k: (0, 0)),              # be0
            pl.BlockSpec((Hp, Lp), lambda i, k: (0, 0)),             # we1_mu
            pl.BlockSpec((1, Lp), lambda i, k: (0, 0)),              # be1_mu
            pl.BlockSpec((Hp, Lp), lambda i, k: (0, 0)),             # we1_lv
            pl.BlockSpec((1, Lp), lambda i, k: (0, 0)),              # be1_lv
            pl.BlockSpec((Lp, Hp), lambda i, k: (0, 0)),             # wd0
            pl.BlockSpec((1, Hp), lambda i, k: (0, 0)),              # bd0
        ],
        out_specs=(
            pl.BlockSpec((block_b, Lp), lambda i, k: (i, 0)),
            pl.BlockSpec((block_b, Lp), lambda i, k: (i, 0)),
            pl.BlockSpec((block_b, Hp), lambda i, k: (i, 0)),
        ),
        scratch_shapes=[
            pltpu.VMEM((block_b, Hp), jnp.float32),   # x @ we0 accumulator
            pltpu.VMEM((block_b, 1), jnp.float32),    # row sum-of-squares
        ],
        compiler_params=pltpu.CompilerParams(
            dimension_semantics=("parallel", "arbitrary"),
            vmem_limit_bytes=vmem_limit),
        cost_estimate=cost_a,
    )(xp, we0p, be0p, we1m, be1m, we1v, be1v, wd0p, bd0p)

    # ---------------- kernel B: decoder output projection --------------------
    cost_b = pl.CostEstimate(
        flops=2 * Bp * Hp * In,
        transcendentals=0,
        bytes_accessed=int(n_ntiles * _nbytes(d_p) + _nbytes(wd1p)
                           + _nbytes(bd1p) + Bp * In * 4))

    logits_p = pl.pallas_call(
        decoder_out_kernel,
        out_shape=jax.ShapeDtypeStruct((Bp, In), f32),
        # N outer / batch inner: each wd1 tile (the dominant HBM stream) is
        # fetched exactly once; only the tiny d tile re-streams per batch tile.
        grid=(In // block_n, Bp // block_b),
        in_specs=[
            pl.BlockSpec((block_b, Hp), lambda n, i: (i, 0)),    # d
            pl.BlockSpec((Hp, block_n), lambda n, i: (0, n)),    # wd1
            pl.BlockSpec((1, block_n), lambda n, i: (0, n)),     # bd1
        ],
        out_specs=pl.BlockSpec((block_b, block_n), lambda n, i: (i, n)),
        compiler_params=pltpu.CompilerParams(
            dimension_semantics=("parallel", "parallel"),
            vmem_limit_bytes=vmem_limit),
        cost_estimate=cost_b,
    )(d_p, wd1p, bd1p)

    return (logits_p[:B, :item_num],
            mu_p[:B, :latent_dim],
            logvar_p[:B, :latent_dim])


# ----------------------------------------------------------------------------
# Parameters & reference
# ----------------------------------------------------------------------------
def init_params(key, item_num, hidden_dim, latent_dim):
    """Xavier-normal weights / N(0, 0.001) biases; weights stored (in, out)."""
    def linear(key, d_in, d_out):
        kw, kb = jax.random.split(key)
        std = jnp.sqrt(2.0 / (d_in + d_out))
        w = jax.random.normal(kw, (d_in, d_out), jnp.float32) * std
        b = jax.random.normal(kb, (1, d_out), jnp.float32) * 0.001
        return w, b

    k0, k1, k2, k3 = jax.random.split(key, 4)
    we0, be0 = linear(k0, item_num, hidden_dim)            # encoder[0]
    we1, be1 = linear(k1, hidden_dim, 2 * latent_dim)      # encoder[1]
    wd0, bd0 = linear(k2, latent_dim, hidden_dim)          # decoder[0]
    wd1, bd1 = linear(k3, hidden_dim, item_num)            # decoder[1]
    return (we0, be0, we1, be1, wd0, bd0, wd1, bd1)


def multivae_reference(x, params, *, latent_dim):
    """Plain-JAX f32 reference mirroring the PyTorch eval-mode forward."""
    we0, be0, we1, be1, wd0, bd0, wd1, bd1 = [
        p.astype(jnp.float32) for p in params]
    hi = jax.lax.Precision.HIGHEST
    norm = jnp.sqrt(jnp.sum(x * x, axis=1, keepdims=True))
    h = x / jnp.maximum(norm, 1e-12)
    h = jnp.tanh(jnp.dot(h, we0, precision=hi) + be0)
    h = jnp.dot(h, we1, precision=hi) + be1
    mu, logvar = h[:, :latent_dim], h[:, latent_dim:]
    z = mu
    d = jnp.tanh(jnp.dot(z, wd0, precision=hi) + bd0)
    return jnp.dot(d, wd1, precision=hi) + bd1, mu, logvar


if __name__ == "__main__":
    # Small shapes; item_num deliberately not a tile multiple -> exercises
    # padding, and explicit small block sizes -> exercises the multi-tile
    # K-reduction and the reordered (N outer) decoder grid.
    batch = 16
    item_num = 1000
    hidden_dim = 256
    latent_dim = 128

    key = jax.random.PRNGKey(0)
    k_x, k_p = jax.random.split(key)

    # Synthetic implicit-feedback input (binary interaction matrix).
    x = jax.random.uniform(k_x, (batch, item_num), jnp.float32)
    x = jnp.where(x > 0.8, 1.0, 0.0)

    we0, be0, we1, be1, wd0, bd0, wd1, bd1 = init_params(
        k_p, item_num, hidden_dim, latent_dim)
    # Weight matrices live in HBM as bf16 (half the DMA traffic / VMEM
    # footprint, native MXU dtype); biases stay f32.
    params = (we0.astype(jnp.bfloat16), be0,
              we1.astype(jnp.bfloat16), be1,
              wd0.astype(jnp.bfloat16), bd0,
              wd1.astype(jnp.bfloat16), bd1)

    logits, mu, logvar = multivae_forward(
        x, params, latent_dim=latent_dim,
        block_b=8, block_k=256, block_n=256)
    jax.block_until_ready((logits, mu, logvar))

    ref_logits, ref_mu, ref_logvar = multivae_reference(
        x, params, latent_dim=latent_dim)

    assert logits.shape == (batch, item_num)
    assert mu.shape == (batch, latent_dim)
    assert logvar.shape == (batch, latent_dim)
    assert jnp.allclose(mu, ref_mu, atol=1e-3, rtol=1e-3)
    assert jnp.allclose(logvar, ref_logvar, atol=1e-3, rtol=1e-3)
    # d is carried as bf16 between the two kernels (exact bf16 weights,
    # f32 accumulation); allow for that quantization on the logits.
    assert jnp.allclose(logits, ref_logits, atol=5e-3, rtol=5e-3)

    print("KERNEL_OK")
</pallas_src>

<mosaic_0001>
module attributes {stable_mosaic.version = 11 : i64} {
  func.func @encoder_kernel(%arg0: i32, %arg1: i32, %arg2: memref<8x256xbf16, #tpu.memory_space<vmem>>, %arg3: memref<256x256xbf16, #tpu.memory_space<vmem>>, %arg4: memref<1x256xf32, #tpu.memory_space<vmem>>, %arg5: memref<256x128xbf16, #tpu.memory_space<vmem>>, %arg6: memref<1x128xf32, #tpu.memory_space<vmem>>, %arg7: memref<256x128xbf16, #tpu.memory_space<vmem>>, %arg8: memref<1x128xf32, #tpu.memory_space<vmem>>, %arg9: memref<128x256xbf16, #tpu.memory_space<vmem>>, %arg10: memref<1x256xf32, #tpu.memory_space<vmem>>, %arg11: memref<8x128xf32, #tpu.memory_space<vmem>>, %arg12: memref<8x128xf32, #tpu.memory_space<vmem>>, %arg13: memref<8x256xbf16, #tpu.memory_space<vmem>>, %arg14: memref<8x256xf32, #tpu.memory_space<vmem>>, %arg15: memref<8x1xf32, #tpu.memory_space<vmem>>) attributes {dimension_semantics = [#tpu.dimension_semantics<parallel>, #tpu.dimension_semantics<arbitrary>], iteration_bounds = array<i64: 2, 4>, scalar_prefetch = 0 : i64, scratch_operands = 2 : i64, tpu.core_type = #tpu.core_type<tc>, window_params = [{transform_indices = @transform_0, window_bounds = array<i64: 8, 256>}, {transform_indices = @transform_1, window_bounds = array<i64: 256, 256>}, {pipeline_mode = #tpu.pipeline_mode<synchronous>, transform_indices = @transform_2, window_bounds = array<i64: 1, 256>}, {pipeline_mode = #tpu.pipeline_mode<synchronous>, transform_indices = @transform_3, window_bounds = array<i64: 256, 128>}, {pipeline_mode = #tpu.pipeline_mode<synchronous>, transform_indices = @transform_4, window_bounds = array<i64: 1, 128>}, {pipeline_mode = #tpu.pipeline_mode<synchronous>, transform_indices = @transform_5, window_bounds = array<i64: 256, 128>}, {pipeline_mode = #tpu.pipeline_mode<synchronous>, transform_indices = @transform_6, window_bounds = array<i64: 1, 128>}, {pipeline_mode = #tpu.pipeline_mode<synchronous>, transform_indices = @transform_7, window_bounds = array<i64: 128, 256>}, {pipeline_mode = #tpu.pipeline_mode<synchronous>, transform_indices = @transform_8, window_bounds = array<i64: 1, 256>}, {transform_indices = @transform_9, window_bounds = array<i64: 8, 128>}, {transform_indices = @transform_10, window_bounds = array<i64: 8, 128>}, {transform_indices = @transform_11, window_bounds = array<i64: 8, 256>}]} {
    %c0_i32 = arith.constant 0 : i32
    %0 = arith.cmpi eq, %arg1, %c0_i32 : i32
    %1 = arith.extui %0 : i1 to i32
    %c0_i32_0 = arith.constant 0 : i32
    %2 = arith.cmpi ne, %1, %c0_i32_0 : i32
    scf.if %2 {
      %cst_14 = arith.constant 0.000000e+00 : f32
      %19 = vector.broadcast %cst_14 : f32 to vector<8x256xf32>
      %c0_15 = arith.constant 0 : index
      %c0_16 = arith.constant 0 : index
      %20 = vector.load %arg14[%c0_15, %c0_16] : memref<8x256xf32, #tpu.memory_space<vmem>>, vector<8x256xf32>
      tpu.vector_store %arg14[%c0_15, %c0_16], %19 {strides = array<i32>} : memref<8x256xf32, #tpu.memory_space<vmem>>, vector<8x256xf32>,
      %cst_17 = arith.constant 0.000000e+00 : f32
      %21 = vector.broadcast %cst_17 : f32 to vector<8x1xf32>
      %c0_18 = arith.constant 0 : index
      %c0_19 = arith.constant 0 : index
      %22 = vector.load %arg15[%c0_18, %c0_19] : memref<8x1xf32, #tpu.memory_space<vmem>>, vector<8x1xf32>
      tpu.vector_store %arg15[%c0_18, %c0_19], %21 {strides = array<i32>} : memref<8x1xf32, #tpu.memory_space<vmem>>, vector<8x1xf32>,
    } else {
    }
    %c0 = arith.constant 0 : index
    %c0_1 = arith.constant 0 : index
    %3 = vector.load %arg2[%c0, %c0_1] : memref<8x256xbf16, #tpu.memory_space<vmem>>, vector<8x256xbf16>
    %c0_2 = arith.constant 0 : index
    %c0_3 = arith.constant 0 : index
    %4 = vector.load %arg14[%c0_2, %c0_3] : memref<8x256xf32, #tpu.memory_space<vmem>>, vector<8x256xf32>
    %c0_4 = arith.constant 0 : index
    %c0_5 = arith.constant 0 : index
    %5 = vector.load %arg3[%c0_4, %c0_5] : memref<256x256xbf16, #tpu.memory_space<vmem>>, vector<256x256xbf16>
    %cst = arith.constant dense<0.000000e+00> : vector<8x256xf32>
    %6 = tpu.matmul %3, %5, %cst {dimension_numbers = #tpu.dot_dimension_numbers<[1], [0], [0], [1], [0, 0, 1, 1], [], []>} : vector<8x256xbf16>, vector<256x256xbf16>, vector<8x256xf32> -> vector<8x256xf32>
    %7 = arith.addf %4, %6 : vector<8x256xf32>
    %c0_6 = arith.constant 0 : index
    %c0_7 = arith.constant 0 : index
    %8 = vector.load %arg14[%c0_6, %c0_7] : memref<8x256xf32, #tpu.memory_space<vmem>>, vector<8x256xf32>
    tpu.vector_store %arg14[%c0_6, %c0_7], %7 {strides = array<i32>} : memref<8x256xf32, #tpu.memory_space<vmem>>, vector<8x256xf32>,
    %9 = arith.extf %3 : vector<8x256xbf16> to vector<8x256xf32>
    %c0_8 = arith.constant 0 : index
    %c0_9 = arith.constant 0 : index
    %10 = vector.load %arg15[%c0_8, %c0_9] : memref<8x1xf32, #tpu.memory_space<vmem>>, vector<8x1xf32>
    %11 = arith.mulf %9, %9 : vector<8x256xf32>
    %cst_10 = arith.constant dense<0.000000e+00> : vector<8xf32>
    %12 = vector.multi_reduction <add>, %11, %cst_10 [1] : vector<8x256xf32> to vector<8xf32>
    %13 = vector.shape_cast %12 : vector<8xf32> to vector<8x1xf32>
    %14 = arith.addf %10, %13 : vector<8x1xf32>
    %c0_11 = arith.constant 0 : index
    %c0_12 = arith.constant 0 : index
    %15 = vector.load %arg15[%c0_11, %c0_12] : memref<8x1xf32, #tpu.memory_space<vmem>>, vector<8x1xf32>
    tpu.vector_store %arg15[%c0_11, %c0_12], %14 {strides = array<i32>} : memref<8x1xf32, #tpu.memory_space<vmem>>, vector<8x1xf32>,
    %c3_i32 = arith.constant 3 : i32
    %16 = arith.cmpi eq, %arg1, %c3_i32 : i32
    %17 = arith.extui %16 : i1 to i32
    %c0_i32_13 = arith.constant 0 : i32
    %18 = arith.cmpi ne, %17, %c0_i32_13 : i32
    scf.if %18 {
      %c0_14 = arith.constant 0 : index
      %c0_15 = arith.constant 0 : index
      %19 = vector.load %arg15[%c0_14, %c0_15] : memref<8x1xf32, #tpu.memory_space<vmem>>, vector<8x1xf32>
      %cst_16 = arith.constant 1.000000e-24 : f32
      %20 = vector.broadcast %cst_16 : f32 to vector<8x1xf32>
      %21 = arith.maximumf %19, %20 : vector<8x1xf32>
      %22 = math.rsqrt %21 : vector<8x1xf32>
      %c0_17 = arith.constant 0 : index
      %c0_18 = arith.constant 0 : index
      %23 = vector.load %arg14[%c0_17, %c0_18] : memref<8x256xf32, #tpu.memory_space<vmem>>, vector<8x256xf32>
      %24 = vector.broadcast %22 : vector<8x1xf32> to vector<8x256xf32>
      %25 = arith.mulf %23, %24 : vector<8x256xf32>
      %c0_19 = arith.constant 0 : index
      %c0_20 = arith.constant 0 : index
      %26 = vector.load %arg4[%c0_19, %c0_20] : memref<1x256xf32, #tpu.memory_space<vmem>>, vector<1x256xf32>
      %27 = vector.broadcast %26 : vector<1x256xf32> to vector<8x256xf32>
      %28 = arith.addf %25, %27 : vector<8x256xf32>
      %29 = math.tanh %28 : vector<8x256xf32>
      %c0_21 = arith.constant 0 : index
      %c0_22 = arith.constant 0 : index
      %30 = vector.load %arg5[%c0_21, %c0_22] : memref<256x128xbf16, #tpu.memory_space<vmem>>, vector<256x128xbf16>
      %31 = arith.extf %30 : vector<256x128xbf16> to vector<256x128xf32>
      %cst_23 = arith.constant dense<0.000000e+00> : vector<8x128xf32>
      %32 = tpu.matmul %29, %31, %cst_23 {dimension_numbers = #tpu.dot_dimension_numbers<[1], [0], [0], [1], [0, 0, 1, 1], [], []>} : vector<8x256xf32>, vector<256x128xf32>, vector<8x128xf32> -> vector<8x128xf32>
      %c0_24 = arith.constant 0 : index
      %c0_25 = arith.constant 0 : index
      %33 = vector.load %arg6[%c0_24, %c0_25] : memref<1x128xf32, #tpu.memory_space<vmem>>, vector<1x128xf32>
      %34 = vector.broadcast %33 : vector<1x128xf32> to vector<8x128xf32>
      %35 = arith.addf %32, %34 : vector<8x128xf32>
      %c0_26 = arith.constant 0 : index
      %c0_27 = arith.constant 0 : index
      %36 = vector.load %arg7[%c0_26, %c0_27] : memref<256x128xbf16, #tpu.memory_space<vmem>>, vector<256x128xbf16>
      %37 = arith.extf %36 : vector<256x128xbf16> to vector<256x128xf32>
      %cst_28 = arith.constant dense<0.000000e+00> : vector<8x128xf32>
      %38 = tpu.matmul %29, %37, %cst_28 {dimension_numbers = #tpu.dot_dimension_numbers<[1], [0], [0], [1], [0, 0, 1, 1], [], []>} : vector<8x256xf32>, vector<256x128xf32>, vector<8x128xf32> -> vector<8x128xf32>
      %c0_29 = arith.constant 0 : index
      %c0_30 = arith.constant 0 : index
      %39 = vector.load %arg8[%c0_29, %c0_30] : memref<1x128xf32, #tpu.memory_space<vmem>>, vector<1x128xf32>
      %40 = vector.broadcast %39 : vector<1x128xf32> to vector<8x128xf32>
      %41 = arith.addf %38, %40 : vector<8x128xf32>
      %c0_31 = arith.constant 0 : index
      %c0_32 = arith.constant 0 : index
      %42 = vector.load %arg11[%c0_31, %c0_32] : memref<8x128xf32, #tpu.memory_space<vmem>>, vector<8x128xf32>
      tpu.vector_store %arg11[%c0_31, %c0_32], %35 {strides = array<i32>} : memref<8x128xf32, #tpu.memory_space<vmem>>, vector<8x128xf32>,
      %c0_33 = arith.constant 0 : index
      %c0_34 = arith.constant 0 : index
      %43 = vector.load %arg12[%c0_33, %c0_34] : memref<8x128xf32, #tpu.memory_space<vmem>>, vector<8x128xf32>
      tpu.vector_store %arg12[%c0_33, %c0_34], %41 {strides = array<i32>} : memref<8x128xf32, #tpu.memory_space<vmem>>, vector<8x128xf32>,
      %c0_35 = arith.constant 0 : index
      %c0_36 = arith.constant 0 : index
      %44 = vector.load %arg9[%c0_35, %c0_36] : memref<128x256xbf16, #tpu.memory_space<vmem>>, vector<128x256xbf16>
      %45 = arith.extf %44 : vector<128x256xbf16> to vector<128x256xf32>
      %cst_37 = arith.constant dense<0.000000e+00> : vector<8x256xf32>
      %46 = tpu.matmul %35, %45, %cst_37 {dimension_numbers = #tpu.dot_dimension_numbers<[1], [0], [0], [1], [0, 0, 1, 1], [], []>} : vector<8x128xf32>, vector<128x256xf32>, vector<8x256xf32> -> vector<8x256xf32>
      %c0_38 = arith.constant 0 : index
      %c0_39 = arith.constant 0 : index
      %47 = vector.load %arg10[%c0_38, %c0_39] : memref<1x256xf32, #tpu.memory_space<vmem>>, vector<1x256xf32>
      %48 = vector.broadcast %47 : vector<1x256xf32> to vector<8x256xf32>
      %49 = arith.addf %46, %48 : vector<8x256xf32>
      %50 = math.tanh %49 : vector<8x256xf32>
      %51 = arith.truncf %50 : vector<8x256xf32> to vector<8x256xbf16>
      %c0_40 = arith.constant 0 : index
      %c0_41 = arith.constant 0 : index
      %52 = vector.load %arg13[%c0_40, %c0_41] : memref<8x256xbf16, #tpu.memory_space<vmem>>, vector<8x256xbf16>
      tpu.vector_store %arg13[%c0_40, %c0_41], %51 {strides = array<i32>} : memref<8x256xbf16, #tpu.memory_space<vmem>>, vector<8x256xbf16>,
    } else {
    }
    return
  }
  func.func @transform_0(%arg0: i32, %arg1: i32) -> (i32, i32) {
    %c0_i32 = arith.constant 0 : i32
    return %arg0, %arg1 : i32, i32
  }
  func.func @transform_1(%arg0: i32, %arg1: i32) -> (i32, i32) {
    %c0_i32 = arith.constant 0 : i32
    %c0_i32_0 = arith.constant 0 : i32
    return %arg1, %c0_i32 : i32, i32
  }
  func.func @transform_2(%arg0: i32, %arg1: i32) -> (i32, i32) {
    %c0_i32 = arith.constant 0 : i32
    %c0_i32_0 = arith.constant 0 : i32
    %c0_i32_1 = arith.constant 0 : i32
    return %c0_i32, %c0_i32_0 : i32, i32
  }
  func.func @transform_3(%arg0: i32, %arg1: i32) -> (i32, i32) {
    %c0_i32 = arith.constant 0 : i32
    %c0_i32_0 = arith.constant 0 : i32
    %c0_i32_1 = arith.constant 0 : i32
    return %c0_i32, %c0_i32_0 : i32, i32
  }
  func.func @transform_4(%arg0: i32, %arg1: i32) -> (i32, i32) {
    %c0_i32 = arith.constant 0 : i32
    %c0_i32_0 = arith.constant 0 : i32
    %c0_i32_1 = arith.constant 0 : i32
    return %c0_i32, %c0_i32_0 : i32, i32
  }
  func.func @transform_5(%arg0: i32, %arg1: i32) -> (i32, i32) {
    %c0_i32 = arith.constant 0 : i32
    %c0_i32_0 = arith.constant 0 : i32
    %c0_i32_1 = arith.constant 0 : i32
    return %c0_i32, %c0_i32_0 : i32, i32
  }
  func.func @transform_6(%arg0: i32, %arg1: i32) -> (i32, i32) {
    %c0_i32 = arith.constant 0 : i32
    %c0_i32_0 = arith.constant 0 : i32
    %c0_i32_1 = arith.constant 0 : i32
    return %c0_i32, %c0_i32_0 : i32, i32
  }
  func.func @transform_7(%arg0: i32, %arg1: i32) -> (i32, i32) {
    %c0_i32 = arith.constant 0 : i32
    %c0_i32_0 = arith.constant 0 : i32
    %c0_i32_1 = arith.constant 0 : i32
    return %c0_i32, %c0_i32_0 : i32, i32
  }
  func.func @transform_8(%arg0: i32, %arg1: i32) -> (i32, i32) {
    %c0_i32 = arith.constant 0 : i32
    %c0_i32_0 = arith.constant 0 : i32
    %c0_i32_1 = arith.constant 0 : i32
    return %c0_i32, %c0_i32_0 : i32, i32
  }
  func.func @transform_9(%arg0: i32, %arg1: i32) -> (i32, i32) {
    %c0_i32 = arith.constant 0 : i32
    %c0_i32_0 = arith.constant 0 : i32
    return %arg0, %c0_i32 : i32, i32
  }
  func.func @transform_10(%arg0: i32, %arg1: i32) -> (i32, i32) {
    %c0_i32 = arith.constant 0 : i32
    %c0_i32_0 = arith.constant 0 : i32
    return %arg0, %c0_i32 : i32, i32
  }
  func.func @transform_11(%arg0: i32, %arg1: i32) -> (i32, i32) {
    %c0_i32 = arith.constant 0 : i32
    %c0_i32_0 = arith.constant 0 : i32
    return %arg0, %c0_i32 : i32, i32
  }
}

</mosaic_0001>

<llo_original>
// kernel: tpu_custom_call.1
$region0: #{tpu_custom_call.1}
  #allocation0 [shape = 'u32[]', space=smem, size = 0x4, offset = 0x4, fixed_abs, tag = 'smem constant byte address 0x4 - core index']
  #allocation1 [shape = 'u32[72,128]{1,0:T(1,128)}', space=vmem, size = 0x9000, scoped, tag = 'internal scratch']
  #allocation2 [shape = 'f32[8,256]{1,0:T(8,128)}', space=vmem, size = 0x2000, scoped, tag = 'scratch operand']
  #allocation3 [shape = 'f32[8,1]{1,0:T(8,128)}', space=vmem, size = 0x1000, scoped, tag = 'scratch operand']
  %s0 = inlined_call_operand.hbm [shape: bf16[16,1024], index: 0, kind: input, shape index: {}]
  %s1 = inlined_call_operand.hbm [shape: bf16[1024,256], index: 1, kind: input, shape index: {}]
  %s2 = inlined_call_operand.hbm [shape: f32[1,256], index: 2, kind: input, shape index: {}]
  %s3 = inlined_call_operand.hbm [shape: bf16[256,128], index: 3, kind: input, shape index: {}]
  %s4 = inlined_call_operand.vmem [shape: f32[1,128], index: 4, kind: input, shape index: {}]
  %s5 = inlined_call_operand.hbm [shape: bf16[256,128], index: 5, kind: input, shape index: {}]
  %s6 = inlined_call_operand.vmem [shape: f32[1,128], index: 6, kind: input, shape index: {}]
  %s7 = inlined_call_operand.hbm [shape: bf16[128,256], index: 7, kind: input, shape index: {}]
  %s8 = inlined_call_operand.vmem [shape: f32[1,256], index: 8, kind: input, shape index: {}]
  %s9 = inlined_call_operand.hbm [shape: f32[16,128], index: 9, kind: output, shape index: {0}]
  %s10 = inlined_call_operand.hbm [shape: f32[16,128], index: 10, kind: output, shape index: {1}]
  %s11 = inlined_call_operand.hbm [shape: bf16[16,256], index: 11, kind: output, shape index: {2}]
  %12 = xla_tuple %s9, %s10, %s11
  %s13 = sld [smem:[#allocation0]]
  $region117: #{tpu_custom_call.1} parent=0
    _
  %s15 = ssub.s32 1, %s13
  %s16 = scalar_select 0, %s15, %s13
  $region1: #{tpu_custom_call.1} parent=0
    #allocation4 [shape = 'u8[8192]{0}', space=vmem, size = 0x2000, scoped, tag = 'input window, operand 0']
    #allocation5 [shape = 's32[2]{0}', space=sflag, size = 0x8, scoped, tag = 'scoped memory for tpu_custom_call.1']
    #allocation6 [shape = 's32[2]{0}', space=sflag, size = 0x8, scoped, tag = 'scoped memory for tpu_custom_call.1']
    #allocation7 [shape = 'u8[262144]{0}', space=vmem, size = 0x40000, scoped, tag = 'input window, operand 1']
    #allocation8 [shape = 's32[2]{0}', space=sflag, size = 0x8, scoped, tag = 'scoped memory for tpu_custom_call.1']
    #allocation9 [shape = 'u8[1024]{0}', space=vmem, size = 0x400, scoped, tag = 'input window, operand 2, single buffered']
    #allocation10 [shape = 'u8[65536]{0}', space=vmem, size = 0x10000, scoped, tag = 'input window, operand 3, single buffered']
    #allocation11 [shape = 's32[1]{0}', space=sflag, size = 0x4, scoped, tag = 'scoped memory for tpu_custom_call.1']
    #allocation12 [shape = 'u8[65536]{0}', space=vmem, size = 0x10000, scoped, tag = 'input window, operand 5, single buffered']
    #allocation13 [shape = 'u8[65536]{0}', space=vmem, size = 0x10000, scoped, tag = 'input window, operand 7, single buffered']
    #allocation14 [shape = 's32[1]{0}', space=sflag, size = 0x4, scoped, tag = 'scoped memory for tpu_custom_call.1']
    #allocation15 [shape = 'u8[8192]{0}', space=vmem, size = 0x2000, scoped, tag = 'output window, operand 0']
    #allocation16 [shape = 'u8[8192]{0}', space=vmem, size = 0x2000, scoped, tag = 'output window, operand 1']
    #allocation17 [shape = 's32[2]{0}', space=sflag, size = 0x8, scoped, tag = 'scoped memory for tpu_custom_call.1']
    #allocation18 [shape = 'u8[8192]{0}', space=vmem, size = 0x2000, scoped, tag = 'output window, operand 2']
    %17 = vsyncpa [#allocation5], 0
    %s18 = scalar_lea.sflag [#allocation5], 1
    %19 = vsyncpa %s18, 0
    %20 = vsyncpa [#allocation8], 0
    %s21 = scalar_lea.sflag [#allocation8], 1
    %22 = vsyncpa %s21, 0
    %23 = vsyncpa [#allocation11], 0
    %24 = vsyncpa [#allocation14], 0
    %25 = vsyncpa [#allocation6], 0
    %s26 = scalar_lea.sflag [#allocation6], 1
    %27 = vsyncpa %s26, 0
    %28 = vsyncpa [#allocation17], 0
    %s29 = scalar_lea.sflag [#allocation17], 1
    %30 = vsyncpa %s29, 0
    loop: start=0, step=1, limit=10
    $region2: #{tpu_custom_call.1} parent=1 // loop_pre_header
      _
    $region3: #{tpu_custom_call.1} parent=1 // loop_header
      %s32 = sphi 0, %s36
      %p33 = scmp.ge.s32.totalorder %s32, 10
      %s39 = sphi 0, %s51
      %s40 = sphi 0, %s47
      %s41 = sphi 0, %s39
      %s42 = sphi 0, %s40
      %s43 = sphi 0, %s41
      %s44 = sphi 0, %s42
      %s56 = sphi 0, %s58
      %s59 = sphi 0, %s56
      %s60 = sphi 0, %s59
      %s76 = sphi 0, %s60
      %s82 = sphi 0, %s84
      %s85 = sphi 0, %s82
      %s86 = sphi 0, %s85
      %s102 = sphi 0, %s86
      %s106 = sphi 0, %s106
      %s108 = sphi 0, %s106
      %s109 = sphi 0, %s108
      %s123 = sphi 0, %s109
      %s127 = sphi 0, %s127
      %s129 = sphi 0, %s127
      %s130 = sphi 0, %s129
      %s144 = sphi 0, %s130
      %s148 = sphi 0, %s148
      %s150 = sphi 0, %s148
      %s151 = sphi 0, %s150
      %s165 = sphi 0, %s151
      %s169 = sphi 0, %s169
      %s171 = sphi 0, %s169
      %s172 = sphi 0, %s171
      %s186 = sphi 0, %s172
      %s190 = sphi 0, %s190
      %s192 = sphi 0, %s190
      %s193 = sphi 0, %s192
      %s207 = sphi 0, %s193
      %s211 = sphi 0, %s211
      %s213 = sphi 0, %s211
      %s214 = sphi 0, %s213
      %s228 = sphi 0, %s214
      %s232 = sphi 0, %s232
      %s234 = sphi 0, %s232
      %s235 = sphi 0, %s234
      %s249 = sphi 0, %s235
      %s255 = sphi 0, %s257
      %s258 = sphi 0, %s255
      %s259 = sphi 0, %s258
      %s275 = sphi 0, %s259
      %s281 = sphi 0, %s283
      %s284 = sphi 0, %s281
      %s285 = sphi 0, %s284
      %s301 = sphi 0, %s285
      %s307 = sphi 0, %s309
      %s310 = sphi 0, %s307
      %s311 = sphi 0, %s310
      %s327 = sphi 0, %s311
    $region4: #{tpu_custom_call.1} parent=1 // loop_header_branch
      %35 = sbr.rel (%p33) target = $region8
    $region5: #{tpu_custom_call.1} parent=1 // loop_body
      %s37 = ssub.s32 %s32, 1
      %s38 = ssub.s32 %s32, 2
      %s45 = sadd.s32 1, %s40
      %p46 = scmp.ge.s32.totalorder %s45, 4
      %s47 = scalar_select %p46, 0, %s45
      %s48 = sadd.s32 1, %s39
      %s49 = scalar_select %p46, %s48, %s39
      %p50 = scmp.ge.s32.totalorder %s49, 2
      %s51 = scalar_select %p50, 0, %s49
      %s52 = ssub.s32 %s39, %s51
      %s53 = ssub.s32 %s40, %s47
      %s54 = sor.u32 %s52, %s53
      %p55 = scmp.eq.s32.totalorder %s54, 0
      %s57 = sadd.s32 %s56, 1
      %s58 = scalar_select %p55, %s56, %s57
      %p61 = pneg %p55
      %p62 = scmp.eq.s32.totalorder %s32, 7
      %p63 = por %p61, %p62
      %p64 = scmp.ne.s32.totalorder %s56, %s59
      %p65 = scmp.eq.s32.totalorder %s32, 0
      %p66 = por %p64, %p65
      %p67 = scmp.ne.s32.totalorder %s56, %s59
      %p68 = scmp.eq.s32.totalorder %s37, 7
      %p69 = por %p67, %p68
      %p70 = scmp.ne.s32.totalorder %s59, %s60
      %p71 = scmp.eq.s32.totalorder %s37, 0
      %p72 = por %p70, %p71
      %p73 = scmp.ne.s32.totalorder %s59, %s60
      %p74 = scmp.eq.s32.totalorder %s38, 7
      %p75 = por %p73, %p74
      %p77 = scmp.ne.s32.totalorder %s60, %s76
      %p78 = scmp.eq.s32.totalorder %s38, 0
      %p79 = por %p77, %p78
      %s80 = ssub.s32 %s40, %s47
      %p81 = scmp.eq.s32.totalorder %s80, 0
      %s83 = sadd.s32 %s82, 1
      %s84 = scalar_select %p81, %s82, %s83
      %p87 = pneg %p81
      %p88 = scmp.eq.s32.totalorder %s32, 7
      %p89 = por %p87, %p88
      %p90 = scmp.ne.s32.totalorder %s82, %s85
      %p91 = scmp.eq.s32.totalorder %s32, 0
      %p92 = por %p90, %p91
      %p93 = scmp.ne.s32.totalorder %s82, %s85
      %p94 = scmp.eq.s32.totalorder %s37, 7
      %p95 = por %p93, %p94
      %p96 = scmp.ne.s32.totalorder %s85, %s86
      %p97 = scmp.eq.s32.totalorder %s37, 0
      %p98 = por %p96, %p97
      %p99 = scmp.ne.s32.totalorder %s85, %s86
      %p100 = scmp.eq.s32.totalorder %s38, 7
      %p101 = por %p99, %p100
      %p103 = scmp.ne.s32.totalorder %s86, %s102
      %p104 = scmp.eq.s32.totalorder %s38, 0
      %p105 = por %p103, %p104
      %s107 = sadd.s32 %s106, 1
      %p110 = scmp.eq.s32.totalorder %s32, 7
      %p111 = scmp.ne.s32.totalorder %s106, %s108
      %p112 = scmp.eq.s32.totalorder %s32, 0
      %p113 = por %p111, %p112
      %p114 = scmp.ne.s32.totalorder %s106, %s108
      %p115 = scmp.eq.s32.totalorder %s37, 7
      %p116 = por %p114, %p115
      %p117 = scmp.ne.s32.totalorder %s108, %s109
      %p118 = scmp.eq.s32.totalorder %s37, 0
      %p119 = por %p117, %p118
      %p120 = scmp.ne.s32.totalorder %s108, %s109
      %p121 = scmp.eq.s32.totalorder %s38, 7
      %p122 = por %p120, %p121
      %p124 = scmp.ne.s32.totalorder %s109, %s123
      %p125 = scmp.eq.s32.totalorder %s38, 0
      %p126 = por %p124, %p125
      %s128 = sadd.s32 %s127, 1
      %p131 = scmp.eq.s32.totalorder %s32, 7
      %p132 = scmp.ne.s32.totalorder %s127, %s129
      %p133 = scmp.eq.s32.totalorder %s32, 0
      %p134 = por %p132, %p133
      %p135 = scmp.ne.s32.totalorder %s127, %s129
      %p136 = scmp.eq.s32.totalorder %s37, 7
      %p137 = por %p135, %p136
      %p138 = scmp.ne.s32.totalorder %s129, %s130
      %p139 = scmp.eq.s32.totalorder %s37, 0
      %p140 = por %p138, %p139
      %p141 = scmp.ne.s32.totalorder %s129, %s130
      %p142 = scmp.eq.s32.totalorder %s38, 7
      %p143 = por %p141, %p142
      %p145 = scmp.ne.s32.totalorder %s130, %s144
      %p146 = scmp.eq.s32.totalorder %s38, 0
      %p147 = por %p145, %p146
      %s149 = sadd.s32 %s148, 1
      %p152 = scmp.eq.s32.totalorder %s32, 7
      %p153 = scmp.ne.s32.totalorder %s148, %s150
      %p154 = scmp.eq.s32.totalorder %s32, 0
      %p155 = por %p153, %p154
      %p156 = scmp.ne.s32.totalorder %s148, %s150
      %p157 = scmp.eq.s32.totalorder %s37, 7
      %p158 = por %p156, %p157
      %p159 = scmp.ne.s32.totalorder %s150, %s151
      %p160 = scmp.eq.s32.totalorder %s37, 0
      %p161 = por %p159, %p160
      %p162 = scmp.ne.s32.totalorder %s150, %s151
      %p163 = scmp.eq.s32.totalorder %s38, 7
      %p164 = por %p162, %p163
      %p166 = scmp.ne.s32.totalorder %s151, %s165
      %p167 = scmp.eq.s32.totalorder %s38, 0
      %p168 = por %p166, %p167
      %s170 = sadd.s32 %s169, 1
      %p173 = scmp.eq.s32.totalorder %s32, 7
      %p174 = scmp.ne.s32.totalorder %s169, %s171
      %p175 = scmp.eq.s32.totalorder %s32, 0
      %p176 = por %p174, %p175
      %p177 = scmp.ne.s32.totalorder %s169, %s171
      %p178 = scmp.eq.s32.totalorder %s37, 7
      %p179 = por %p177, %p178
      %p180 = scmp.ne.s32.totalorder %s171, %s172
      %p181 = scmp.eq.s32.totalorder %s37, 0
      %p182 = por %p180, %p181
      %p183 = scmp.ne.s32.totalorder %s171, %s172
      %p184 = scmp.eq.s32.totalorder %s38, 7
      %p185 = por %p183, %p184
      %p187 = scmp.ne.s32.totalorder %s172, %s186
      %p188 = scmp.eq.s32.totalorder %s38, 0
      %p189 = por %p187, %p188
      %s191 = sadd.s32 %s190, 1
      %p194 = scmp.eq.s32.totalorder %s32, 7
      %p195 = scmp.ne.s32.totalorder %s190, %s192
      %p196 = scmp.eq.s32.totalorder %s32, 0
      %p197 = por %p195, %p196
      %p198 = scmp.ne.s32.totalorder %s190, %s192
      %p199 = scmp.eq.s32.totalorder %s37, 7
      %p200 = por %p198, %p199
      %p201 = scmp.ne.s32.totalorder %s192, %s193
      %p202 = scmp.eq.s32.totalorder %s37, 0
      %p203 = por %p201, %p202
      %p204 = scmp.ne.s32.totalorder %s192, %s193
      %p205 = scmp.eq.s32.totalorder %s38, 7
      %p206 = por %p204, %p205
      %p208 = scmp.ne.s32.totalorder %s193, %s207
      %p209 = scmp.eq.s32.totalorder %s38, 0
      %p210 = por %p208, %p209
      %s212 = sadd.s32 %s211, 1
      %p215 = scmp.eq.s32.totalorder %s32, 7
      %p216 = scmp.ne.s32.totalorder %s211, %s213
      %p217 = scmp.eq.s32.totalorder %s32, 0
      %p218 = por %p216, %p217
      %p219 = scmp.ne.s32.totalorder %s211, %s213
      %p220 = scmp.eq.s32.totalorder %s37, 7
      %p221 = por %p219, %p220
      %p222 = scmp.ne.s32.totalorder %s213, %s214
      %p223 = scmp.eq.s32.totalorder %s37, 0
      %p224 = por %p222, %p223
      %p225 = scmp.ne.s32.totalorder %s213, %s214
      %p226 = scmp.eq.s32.totalorder %s38, 7
      %p227 = por %p225, %p226
      %p229 = scmp.ne.s32.totalorder %s214, %s228
      %p230 = scmp.eq.s32.totalorder %s38, 0
      %p231 = por %p229, %p230
      %s233 = sadd.s32 %s232, 1
      %p236 = scmp.eq.s32.totalorder %s32, 7
      %p237 = scmp.ne.s32.totalorder %s232, %s234
      %p238 = scmp.eq.s32.totalorder %s32, 0
      %p239 = por %p237, %p238
      %p240 = scmp.ne.s32.totalorder %s232, %s234
      %p241 = scmp.eq.s32.totalorder %s37, 7
      %p242 = por %p240, %p241
      %p243 = scmp.ne.s32.totalorder %s234, %s235
      %p244 = scmp.eq.s32.totalorder %s37, 0
      %p245 = por %p243, %p244
      %p246 = scmp.ne.s32.totalorder %s234, %s235
      %p247 = scmp.eq.s32.totalorder %s38, 7
      %p248 = por %p246, %p247
      %p250 = scmp.ne.s32.totalorder %s235, %s249
      %p251 = scmp.eq.s32.totalorder %s38, 0
      %p252 = por %p250, %p251
      %s253 = ssub.s32 %s39, %s51
      %p254 = scmp.eq.s32.totalorder %s253, 0
      %s256 = sadd.s32 %s255, 1
      %s257 = scalar_select %p254, %s255, %s256
      %p260 = pneg %p254
      %p261 = scmp.eq.s32.totalorder %s32, 7
      %p262 = por %p260, %p261
      %p263 = scmp.ne.s32.totalorder %s255, %s258
      %p264 = scmp.eq.s32.totalorder %s32, 0
      %p265 = por %p263, %p264
      %p266 = scmp.ne.s32.totalorder %s255, %s258
      %p267 = scmp.eq.s32.totalorder %s37, 7
      %p268 = por %p266, %p267
      %p269 = scmp.ne.s32.totalorder %s258, %s259
      %p270 = scmp.eq.s32.totalorder %s37, 0
      %p271 = por %p269, %p270
      %p272 = scmp.ne.s32.totalorder %s258, %s259
      %p273 = scmp.eq.s32.totalorder %s38, 7
      %p274 = por %p272, %p273
      %p276 = scmp.ne.s32.totalorder %s259, %s275
      %p277 = scmp.eq.s32.totalorder %s38, 0
      %p278 = por %p276, %p277
      %s279 = ssub.s32 %s39, %s51
      %p280 = scmp.eq.s32.totalorder %s279, 0
      %s282 = sadd.s32 %s281, 1
      %s283 = scalar_select %p280, %s281, %s282
      %p286 = pneg %p280
      %p287 = scmp.eq.s32.totalorder %s32, 7
      %p288 = por %p286, %p287
      %p289 = scmp.ne.s32.totalorder %s281, %s284
      %p290 = scmp.eq.s32.totalorder %s32, 0
      %p291 = por %p289, %p290
      %p292 = scmp.ne.s32.totalorder %s281, %s284
      %p293 = scmp.eq.s32.totalorder %s37, 7
      %p294 = por %p292, %p293
      %p295 = scmp.ne.s32.totalorder %s284, %s285
      %p296 = scmp.eq.s32.totalorder %s37, 0
      %p297 = por %p295, %p296
      %p298 = scmp.ne.s32.totalorder %s284, %s285
      %p299 = scmp.eq.s32.totalorder %s38, 7
      %p300 = por %p298, %p299
      %p302 = scmp.ne.s32.totalorder %s285, %s301
      %p303 = scmp.eq.s32.totalorder %s38, 0
      %p304 = por %p302, %p303
      %s305 = ssub.s32 %s39, %s51
      %p306 = scmp.eq.s32.totalorder %s305, 0
      %s308 = sadd.s32 %s307, 1
      %s309 = scalar_select %p306, %s307, %s308
      %p312 = pneg %p306
      %p313 = scmp.eq.s32.totalorder %s32, 7
      %p314 = por %p312, %p313
      %p315 = scmp.ne.s32.totalorder %s307, %s310
      %p316 = scmp.eq.s32.totalorder %s32, 0
      %p317 = por %p315, %p316
      %p318 = scmp.ne.s32.totalorder %s307, %s310
      %p319 = scmp.eq.s32.totalorder %s37, 7
      %p320 = por %p318, %p319
      %p321 = scmp.ne.s32.totalorder %s310, %s311
      %p322 = scmp.eq.s32.totalorder %s37, 0
      %p323 = por %p321, %p322
      %p324 = scmp.ne.s32.totalorder %s310, %s311
      %p325 = scmp.eq.s32.totalorder %s38, 7
      %p326 = por %p324, %p325
      %p328 = scmp.ne.s32.totalorder %s311, %s327
      %p329 = scmp.eq.s32.totalorder %s38, 0
      %p330 = por %p328, %p329
      %p331 = scmp.le.s32.totalorder 1, %s32
      %p332 = scmp.lt.s32.totalorder %s32, 9
      %p333 = pnand %p331, %p332
      %p334 = pneg %p333
      // Predicated region
      $region9: #{tpu_custom_call.1} parent=5 // pred_check
        _
      $region10: #{tpu_custom_call.1} parent=5 // pred_check_branch
        %336 = sbr.rel (%p333) target = $region12
      $region11: #{tpu_custom_call.1} parent=5 // pred_region
        %s337 = ssub.s32 %s32, 1
        // Predicated region
        $region13: #{tpu_custom_call.1} parent=11 // pred_check
          %p338 = pneg %p119
        $region14: #{tpu_custom_call.1} parent=11 // pred_check_branch
          %340 = sbr.rel (%p338) target = $region16
        $region15: #{tpu_custom_call.1} parent=11 // pred_region
          %342 = vsyncadd [#allocation8], 0
          %s344 = sshll.u32 %s2, 4
          %s345 = int_to_ptr.hbm [resolvable:$true] %s344
          %s346 = sshll.u32 [#allocation9], 4
          %s347 = int_to_ptr.vmem [resolvable:$true] %s346
          %349 = dma.hbm_to_vmem [thread:$0]  %s345, 32, %s347, [#allocation8]
        $region16: #{tpu_custom_call.1} parent=11 // pred_fallthru
          _
        // Predicated region
        $region17: #{tpu_custom_call.1} parent=11 // pred_check
          %p350 = pneg %p140
        $region18: #{tpu_custom_call.1} parent=11 // pred_check_branch
          %352 = sbr.rel (%p350) target = $region20
        $region19: #{tpu_custom_call.1} parent=11 // pred_region
          %354 = vsyncadd [#allocation11], 0
          %s355 = sshll.u32 %s3, 4
          %s356 = int_to_ptr.hbm [resolvable:$true] %s355
          %s357 = sshll.u32 [#allocation10], 4
          %s358 = int_to_ptr.vmem [resolvable:$true] %s357
          %363 = dma.hbm_to_vmem [thread:$0]  %s356, 2048, %s358, [#allocation11], 64, 64, 4
        $region20: #{tpu_custom_call.1} parent=11 // pred_fallthru
          _
        // Predicated region
        $region21: #{tpu_custom_call.1} parent=11 // pred_check
          %p364 = pneg %p161
        $region22: #{tpu_custom_call.1} parent=11 // pred_check_branch
          %366 = sbr.rel (%p364) target = $region24
        $region23: #{tpu_custom_call.1} parent=11 // pred_region
          _
        $region24: #{tpu_custom_call.1} parent=11 // pred_fallthru
          _
        // Predicated region
        $region25: #{tpu_custom_call.1} parent=11 // pred_check
          %p367 = pneg %p182
        $region26: #{tpu_custom_call.1} parent=11 // pred_check_branch
          %369 = sbr.rel (%p367) target = $region28
        $region27: #{tpu_custom_call.1} parent=11 // pred_region
          %371 = vsyncadd [#allocation11], 0
          %s372 = sshll.u32 %s5, 4
          %s373 = int_to_ptr.hbm [resolvable:$true] %s372
          %s374 = sshll.u32 [#allocation12], 4
          %s375 = int_to_ptr.vmem [resolvable:$true] %s374
          %380 = dma.hbm_to_vmem [thread:$0]  %s373, 2048, %s375, [#allocation11], 64, 64, 4
        $region28: #{tpu_custom_call.1} parent=11 // pred_fallthru
          _
        // Predicated region
        $region29: #{tpu_custom_call.1} parent=11 // pred_check
          %p381 = pneg %p203
        $region30: #{tpu_custom_call.1} parent=11 // pred_check_branch
          %383 = sbr.rel (%p381) target = $region32
        $region31: #{tpu_custom_call.1} parent=11 // pred_region
          _
        $region32: #{tpu_custom_call.1} parent=11 // pred_fallthru
          _
        // Predicated region
        $region33: #{tpu_custom_call.1} parent=11 // pred_check
          %p384 = pneg %p224
        $region34: #{tpu_custom_call.1} parent=11 // pred_check_branch
          %386 = sbr.rel (%p384) target = $region36
        $region35: #{tpu_custom_call.1} parent=11 // pred_region
          %388 = vsyncadd [#allocation14], 0
          %s389 = sshll.u32 %s7, 4
          %s390 = int_to_ptr.hbm [resolvable:$true] %s389
          %s391 = sshll.u32 [#allocation13], 4
          %s392 = int_to_ptr.vmem [resolvable:$true] %s391
          %397 = dma.hbm_to_vmem [thread:$0]  %s390, 2048, %s392, [#allocation14], 128, 128, 8
        $region36: #{tpu_custom_call.1} parent=11 // pred_fallthru
          _
        // Predicated region
        $region37: #{tpu_custom_call.1} parent=11 // pred_check
          %p398 = pneg %p245
        $region38: #{tpu_custom_call.1} parent=11 // pred_check_branch
          %400 = sbr.rel (%p398) target = $region40
        $region39: #{tpu_custom_call.1} parent=11 // pred_region
          _
        $region40: #{tpu_custom_call.1} parent=11 // pred_fallthru
          _
      $region12: #{tpu_custom_call.1} parent=5 // pred_fallthru
        _
      %p401 = scmp.lt.s32.totalorder %s32, 8
      // Predicated region
      $region41: #{tpu_custom_call.1} parent=5 // pred_check
        %p402 = pneg %p401
      $region42: #{tpu_custom_call.1} parent=5 // pred_check_branch
        %404 = sbr.rel (%p402) target = $region44
      $region43: #{tpu_custom_call.1} parent=5 // pred_region
        // Predicated region
        $region45: #{tpu_custom_call.1} parent=43 // pred_check
          %p405 = pneg %p66
        $region46: #{tpu_custom_call.1} parent=43 // pred_check_branch
          %407 = sbr.rel (%p405) target = $region48
        $region47: #{tpu_custom_call.1} parent=43 // pred_region
          %s408 = sand.u32 %s56, 1
          %s409 = scalar_lea.sflag [#allocation5], %s408
          %s410 = sand.u32 %s56, 1
          %s411 = smul.addr %s410, 8
          %s412 = scalar_lea.vmem [#allocation4], %s411
          %s413 = smul.u32 2, %s40
          %415 = vsyncadd %s409, 0
          %s416 = smul.addr %s39, 8
          %s417 = sadd.s32 %s413, %s416
          %s418 = smul.addr %s417, 4
          %s419 = scalar_lea.hbm %s0, %s418
          %s421 = sshll.u32 %s419, 4
          %s422 = int_to_ptr.hbm [resolvable:$true] %s421
          %s423 = sshll.u32 %s412, 4
          %s424 = int_to_ptr.vmem [resolvable:$true] %s423
          %426 = dma.hbm_to_vmem [thread:$0]  %s422, 128, %s424, %s409
        $region48: #{tpu_custom_call.1} parent=43 // pred_fallthru
          _
        // Predicated region
        $region49: #{tpu_custom_call.1} parent=43 // pred_check
          %p427 = pneg %p92
        $region50: #{tpu_custom_call.1} parent=43 // pred_check_branch
          %429 = sbr.rel (%p427) target = $region52
        $region51: #{tpu_custom_call.1} parent=43 // pred_region
          %s430 = sand.u32 %s32, 1
          %s431 = scalar_lea.sflag [#allocation8], %s430
          %s432 = sand.u32 %s82, 1
          %s433 = smul.addr %s432, 256
          %s434 = scalar_lea.vmem [#allocation7], %s433
          %s435 = smul.u32 32, %s40
          %437 = vsyncadd %s431, 0
          %s438 = smul.addr %s435, 2
          %s439 = smul.addr %s438, 4
          %s440 = scalar_lea.hbm %s1, %s439
          %s441 = sshll.u32 %s440, 4
          %s442 = int_to_ptr.hbm [resolvable:$true] %s441
          %s443 = sshll.u32 %s434, 4
          %s444 = int_to_ptr.vmem [resolvable:$true] %s443
          %449 = dma.hbm_to_vmem [thread:$0]  %s442, 4096, %s444, %s431, 128, 128, 8
        $region52: #{tpu_custom_call.1} parent=43 // pred_fallthru
          _
      $region44: #{tpu_custom_call.1} parent=5 // pred_fallthru
        _
      %p450 = scmp.le.s32.totalorder 1, %s32
      %p451 = scmp.lt.s32.totalorder %s32, 9
      %p452 = pnand %p450, %p451
      %p453 = pneg %p452
      // Predicated region
      $region53: #{tpu_custom_call.1} parent=5 // pred_check
        _
      $region54: #{tpu_custom_call.1} parent=5 // pred_check_branch
        %455 = sbr.rel (%p452) target = $region56
      $region55: #{tpu_custom_call.1} parent=5 // pred_region
        %s456 = ssub.s32 %s32, 1
        %s457 = sand.u32 %s59, 1
        %s458 = scalar_lea.sflag [#allocation5], %s457
        %s459 = sand.u32 %s59, 1
        %s460 = smul.addr %s459, 8
        %s461 = scalar_lea.vmem [#allocation4], %s460
        // Predicated region
        $region57: #{tpu_custom_call.1} parent=55 // pred_check
          %p462 = pneg %p72
        $region58: #{tpu_custom_call.1} parent=55 // pred_check_branch
          %464 = sbr.rel (%p462) target = $region60
        $region59: #{tpu_custom_call.1} parent=55 // pred_region
          %466 = dma.done %s458, 128
        $region60: #{tpu_custom_call.1} parent=55 // pred_fallthru
          _
        %s467 = sand.u32 %s37, 1
        %s468 = scalar_lea.sflag [#allocation8], %s467
        %s469 = sand.u32 %s85, 1
        %s470 = smul.addr %s469, 256
        %s471 = scalar_lea.vmem [#allocation7], %s470
        // Predicated region
        $region61: #{tpu_custom_call.1} parent=55 // pred_check
          %p472 = pneg %p98
        $region62: #{tpu_custom_call.1} parent=55 // pred_check_branch
          %474 = sbr.rel (%p472) target = $region64
        $region63: #{tpu_custom_call.1} parent=55 // pred_region
          %476 = dma.done %s468, 4096
        $region64: #{tpu_custom_call.1} parent=55 // pred_fallthru
          _
        // Predicated region
        $region65: #{tpu_custom_call.1} parent=55 // pred_check
          %p477 = pneg %p119
        $region66: #{tpu_custom_call.1} parent=55 // pred_check_branch
          %479 = sbr.rel (%p477) target = $region68
        $region67: #{tpu_custom_call.1} parent=55 // pred_region
          %481 = dma.done [#allocation8], 32
        $region68: #{tpu_custom_call.1} parent=55 // pred_fallthru
          _
        // Predicated region
        $region69: #{tpu_custom_call.1} parent=55 // pred_check
          %p482 = pneg %p140
        $region70: #{tpu_custom_call.1} parent=55 // pred_check_branch
          %484 = sbr.rel (%p482) target = $region72
        $region71: #{tpu_custom_call.1} parent=55 // pred_region
          %486 = dma.done [#allocation11], 2048
        $region72: #{tpu_custom_call.1} parent=55 // pred_fallthru
          _
        // Predicated region
        $region73: #{tpu_custom_call.1} parent=55 // pred_check
          %p487 = pneg %p182
        $region74: #{tpu_custom_call.1} parent=55 // pred_check_branch
          %489 = sbr.rel (%p487) target = $region76
        $region75: #{tpu_custom_call.1} parent=55 // pred_region
          %491 = dma.done [#allocation11], 2048
        $region76: #{tpu_custom_call.1} parent=55 // pred_fallthru
          _
        // Predicated region
        $region77: #{tpu_custom_call.1} parent=55 // pred_check
          %p492 = pneg %p224
        $region78: #{tpu_custom_call.1} parent=55 // pred_check_branch
          %494 = sbr.rel (%p492) target = $region80
        $region79: #{tpu_custom_call.1} parent=55 // pred_region
          %496 = dma.done [#allocation14], 2048
        $region80: #{tpu_custom_call.1} parent=55 // pred_fallthru
          _
        %s497 = sand.u32 %s59, 1
        %s498 = scalar_lea.sflag [#allocation5], %s497
        %s499 = sand.u32 %s59, 1
        %s500 = smul.addr %s499, 8
        %s501 = scalar_lea.vmem [#allocation4], %s500
        %p502 = pneg %p72
        %p503 = pneg %p69
        %s504 = sand.u32 %s37, 1
        %s505 = scalar_lea.sflag [#allocation8], %s504
        %s506 = sand.u32 %s85, 1
        %s507 = smul.addr %s506, 256
        %s508 = scalar_lea.vmem [#allocation7], %s507
        %p509 = pneg %p98
        %p510 = pneg %p95
        %p511 = pneg %p119
        %p512 = pneg %p116
        %p513 = pneg %p140
        %p514 = pneg %p137
        %p515 = pneg %p161
        %p516 = pneg %p158
        %p517 = pneg %p182
        %p518 = pneg %p179
        %p519 = pneg %p203
        %p520 = pneg %p200
        %p521 = pneg %p224
        %p522 = pneg %p221
        %p523 = pneg %p245
        %p524 = pneg %p242
        %p525 = pneg %p271
        %p526 = pneg %p268
        %s527 = sand.u32 %s258, 1
        %s528 = scalar_lea.sflag [#allocation6], %s527
        %s529 = sand.u32 %s258, 1
        %s530 = smul.addr %s529, 8
        %s531 = scalar_lea.vmem [#allocation15], %s530
        %p532 = pneg %p297
        %p533 = pneg %p294
        %s534 = sand.u32 %s37, 1
        %s535 = scalar_lea.sflag [#allocation17], %s534
        %s536 = sand.u32 %s284, 1
        %s537 = smul.addr %s536, 8
        %s538 = scalar_lea.vmem [#allocation16], %s537
        %p539 = pneg %p323
        %p540 = pneg %p320
        %s541 = sand.u32 %s37, 1
        %s542 = scalar_lea.sflag [#allocation17], %s541
        %s543 = sand.u32 %s310, 1
        %s544 = smul.addr %s543, 8
        %s545 = scalar_lea.vmem [#allocation18], %s544
        %s546 = smul.u32 2, %s42
        %s547 = smul.u32 32, %s42
        %p548 = scmp.eq.s32.totalorder %s42, 0
        // Predicated region
        $region81: #{tpu_custom_call.1} parent=55 // pred_check
          %p549 = pneg %p548
        $region82: #{tpu_custom_call.1} parent=55 // pred_check_branch
          %551 = sbr.rel (%p549) target = $region84
        $region83: #{tpu_custom_call.1} parent=55 // pred_region
          %552 = vst [vmem:[#allocation2] sm:$0xff] 0.0
          %553 = vst [vmem:[#allocation2 + $0x8] sm:$0xff] 0.0
          %vm554 = vcmask 7168
          %555 = vst.msk [vmem:[#allocation3] sm:$0xff] %vm554, 0.0
        $region84: #{tpu_custom_call.1} parent=55 // pred_fallthru
          _
        %v556 = vld [vmem:[%s461] sm:$0xff]
        %v557 = vld [vmem:[#allocation2] sm:$0xff]
        %v558 = vld [vmem:[#allocation2 + $0x8] sm:$0xff]
        %v559 = vld [vmem:[%s471] sm:$0xff]
        %v560 = vld [vmem:[%s471 + $0x8] sm:$0xff]
        %v561 = vld [vmem:[%s471 + $0x10] sm:$0xff]
        %v562 = vld [vmem:[%s471 + $0x18] sm:$0xff]
        %v563 = vld [vmem:[%s471 + $0x20] sm:$0xff]
        %v564 = vld [vmem:[%s471 + $0x28] sm:$0xff]
        %v565 = vld [vmem:[%s471 + $0x30] sm:$0xff]
        %v566 = vld [vmem:[%s471 + $0x38] sm:$0xff]
        %v567 = vld [vmem:[%s471 + $0x40] sm:$0xff]
        %v568 = vld [vmem:[%s471 + $0x48] sm:$0xff]
        %v569 = vld [vmem:[%s471 + $0x50] sm:$0xff]
        %v570 = vld [vmem:[%s471 + $0x58] sm:$0xff]
        %v571 = vld [vmem:[%s471 + $0x60] sm:$0xff]
        %v572 = vld [vmem:[%s471 + $0x68] sm:$0xff]
        %v573 = vld [vmem:[%s471 + $0x70] sm:$0xff]
        %v574 = vld [vmem:[%s471 + $0x78] sm:$0xff]
        %v575 = vld [vmem:[%s471 + $0x80] sm:$0xff]
        %v576 = vld [vmem:[%s471 + $0x88] sm:$0xff]
        %v577 = vld [vmem:[%s471 + $0x90] sm:$0xff]
        %v578 = vld [vmem:[%s471 + $0x98] sm:$0xff]
        %v579 = vld [vmem:[%s471 + $0xa0] sm:$0xff]
        %v580 = vld [vmem:[%s471 + $0xa8] sm:$0xff]
        %v581 = vld [vmem:[%s471 + $0xb0] sm:$0xff]
        %v582 = vld [vmem:[%s471 + $0xb8] sm:$0xff]
        %v583 = vld [vmem:[%s471 + $0xc0] sm:$0xff]
        %v584 = vld [vmem:[%s471 + $0xc8] sm:$0xff]
        %v585 = vld [vmem:[%s471 + $0xd0] sm:$0xff]
        %v586 = vld [vmem:[%s471 + $0xd8] sm:$0xff]
        %v587 = vld [vmem:[%s471 + $0xe0] sm:$0xff]
        %v588 = vld [vmem:[%s471 + $0xe8] sm:$0xff]
        %v589 = vld [vmem:[%s471 + $0xf0] sm:$0xff]
        %v590 = vld [vmem:[%s471 + $0xf8] sm:$0xff]
        %v592 = vunpack.c.l.b16 %v556
        %v593 = vunpack.c.h.b16 %v556
        %v594 = vpack.c.b16 %v592, %v592
        %v595 = vpack.c.b16 %v593, %v593
        %v630 = vunpack.c.l.b16 %v559
        %v631 = vunpack.c.h.b16 %v559
        %v632 = vunpack.c.l.b16 %v560
        %v633 = vunpack.c.h.b16 %v560
        %v634 = vunpack.c.l.b16 %v561
        %v635 = vunpack.c.h.b16 %v561
        %v636 = vunpack.c.l.b16 %v562
        %v637 = vunpack.c.h.b16 %v562
        %v638 = vunpack.c.l.b16 %v563
        %v639 = vunpack.c.h.b16 %v563
        %v640 = vunpack.c.l.b16 %v564
        %v641 = vunpack.c.h.b16 %v564
        %v642 = vunpack.c.l.b16 %v565
        %v643 = vunpack.c.h.b16 %v565
        %v644 = vunpack.c.l.b16 %v566
        %v645 = vunpack.c.h.b16 %v566
        %v646 = vunpack.c.l.b16 %v567
        %v647 = vunpack.c.h.b16 %v567
        %v648 = vunpack.c.l.b16 %v568
        %v649 = vunpack.c.h.b16 %v568
        %v650 = vunpack.c.l.b16 %v569
        %v651 = vunpack.c.h.b16 %v569
        %v652 = vunpack.c.l.b16 %v570
        %v653 = vunpack.c.h.b16 %v570
        %v654 = vunpack.c.l.b16 %v571
        %v655 = vunpack.c.h.b16 %v571
        %v656 = vunpack.c.l.b16 %v572
        %v657 = vunpack.c.h.b16 %v572
        %v658 = vunpack.c.l.b16 %v573
        %v659 = vunpack.c.h.b16 %v573
        %v660 = vunpack.c.l.b16 %v574
        %v661 = vunpack.c.h.b16 %v574
        %v662 = vunpack.c.l.b16 %v575
        %v663 = vunpack.c.h.b16 %v575
        %v664 = vunpack.c.l.b16 %v576
        %v665 = vunpack.c.h.b16 %v576
        %v666 = vunpack.c.l.b16 %v577
        %v667 = vunpack.c.h.b16 %v577
        %v668 = vunpack.c.l.b16 %v578
        %v669 = vunpack.c.h.b16 %v578
        %v670 = vunpack.c.l.b16 %v579
        %v671 = vunpack.c.h.b16 %v579
        %v672 = vunpack.c.l.b16 %v580
        %v673 = vunpack.c.h.b16 %v580
        %v674 = vunpack.c.l.b16 %v581
        %v675 = vunpack.c.h.b16 %v581
        %v676 = vunpack.c.l.b16 %v582
        %v677 = vunpack.c.h.b16 %v582
        %v678 = vunpack.c.l.b16 %v583
        %v679 = vunpack.c.h.b16 %v583
        %v680 = vunpack.c.l.b16 %v584
        %v681 = vunpack.c.h.b16 %v584
        %v682 = vunpack.c.l.b16 %v585
        %v683 = vunpack.c.h.b16 %v585
        %v684 = vunpack.c.l.b16 %v586
        %v685 = vunpack.c.h.b16 %v586
        %v686 = vunpack.c.l.b16 %v587
        %v687 = vunpack.c.h.b16 %v587
        %v688 = vunpack.c.l.b16 %v588
        %v689 = vunpack.c.h.b16 %v588
        %v690 = vunpack.c.l.b16 %v589
        %v691 = vunpack.c.h.b16 %v589
        %v692 = vunpack.c.l.b16 %v590
        %v693 = vunpack.c.h.b16 %v590
        %v694 = vpack.c.b16 %v632, %v630
        %v695 = vpack.c.b16 %v633, %v631
        %v696 = vpack.c.b16 %v636, %v634
        %v697 = vpack.c.b16 %v637, %v635
        %v698 = vpack.c.b16 %v640, %v638
        %v699 = vpack.c.b16 %v641, %v639
        %v700 = vpack.c.b16 %v644, %v642
        %v701 = vpack.c.b16 %v645, %v643
        %v702 = vpack.c.b16 %v648, %v646
        %v703 = vpack.c.b16 %v649, %v647
        %v704 = vpack.c.b16 %v652, %v650
        %v705 = vpack.c.b16 %v653, %v651
        %v706 = vpack.c.b16 %v656, %v654
        %v707 = vpack.c.b16 %v657, %v655
        %v708 = vpack.c.b16 %v660, %v658
        %v709 = vpack.c.b16 %v661, %v659
        %v710 = vpack.c.b16 %v664, %v662
        %v711 = vpack.c.b16 %v665, %v663
        %v712 = vpack.c.b16 %v668, %v666
        %v713 = vpack.c.b16 %v669, %v667
        %v714 = vpack.c.b16 %v672, %v670
        %v715 = vpack.c.b16 %v673, %v671
        %v716 = vpack.c.b16 %v676, %v674
        %v717 = vpack.c.b16 %v677, %v675
        %v718 = vpack.c.b16 %v680, %v678
        %v719 = vpack.c.b16 %v681, %v679
        %v720 = vpack.c.b16 %v684, %v682
        %v721 = vpack.c.b16 %v685, %v683
        %v722 = vpack.c.b16 %v688, %v686
        %v723 = vpack.c.b16 %v689, %v687
        %v724 = vpack.c.b16 %v692, %v690
        %v725 = vpack.c.b16 %v693, %v691
        %758 = vmatpush.bf16.msra.mxu0 %v708
        %759 = vmatpush.bf16.msra.mxu0 %v706
        %760 = vmatpush.bf16.msra.mxu0 %v704
        %761 = vmatpush.bf16.msra.mxu0 %v702
        %762 = vmatpush.bf16.msra.mxu0 %v700
        %763 = vmatpush.bf16.msra.mxu0 %v698
        %764 = vmatpush.bf16.msra.mxu0 %v696
        %765 = vmatpush.bf16.msra.mxu0 %v694
        %766 = vmatmul.bf16.gmra.mxu0 %v594
        %v767 = vpop.f32.mrf.mxu0
        %v768 = vadd.f32 0.0, %v767
        %v769 = vpop.f32.mrf.mxu0
        %770 = vdwg.mxu0
        %771 = vmatpush.bf16.msra.mxu0 %v724
        %772 = vmatpush.bf16.msra.mxu0 %v722
        %773 = vmatpush.bf16.msra.mxu0 %v720
        %774 = vmatpush.bf16.msra.mxu0 %v718
        %775 = vmatpush.bf16.msra.mxu0 %v716
        %776 = vmatpush.bf16.msra.mxu0 %v714
        %777 = vmatpush.bf16.msra.mxu0 %v712
        %778 = vmatpush.bf16.msra.mxu0 %v710
        %779 = vmatmul.bf16.gmra.mxu0 %v595
        %v780 = vpop.f32.mrf.mxu0
        %v781 = vadd.f32 %v768, %v780
        %v782 = vpop.f32.mrf.mxu0
        %783 = vdwg.mxu0
        %784 = vmatpush.bf16.msra.mxu0 %v709
        %785 = vmatpush.bf16.msra.mxu0 %v707
        %786 = vmatpush.bf16.msra.mxu0 %v705
        %787 = vmatpush.bf16.msra.mxu0 %v703
        %788 = vmatpush.bf16.msra.mxu0 %v701
        %789 = vmatpush.bf16.msra.mxu0 %v699
        %790 = vmatpush.bf16.msra.mxu0 %v697
        %791 = vmatpush.bf16.msra.mxu0 %v695
        %792 = vmatmul.bf16.gmra.mxu0 %v594
        %v793 = vpop.f32.mrf.mxu0
        %v794 = vadd.f32 0.0, %v793
        %v795 = vpop.f32.mrf.mxu0
        %796 = vdwg.mxu0
        %797 = vmatpush.bf16.msra.mxu0 %v725
        %798 = vmatpush.bf16.msra.mxu0 %v723
        %799 = vmatpush.bf16.msra.mxu0 %v721
        %800 = vmatpush.bf16.msra.mxu0 %v719
        %801 = vmatpush.bf16.msra.mxu0 %v717
        %802 = vmatpush.bf16.msra.mxu0 %v715
        %803 = vmatpush.bf16.msra.mxu0 %v713
        %804 = vmatpush.bf16.msra.mxu0 %v711
        %805 = vmatmul.bf16.gmra.mxu0 %v595
        %v806 = vpop.f32.mrf.mxu0
        %v807 = vadd.f32 %v794, %v806
        %v808 = vpop.f32.mrf.mxu0
        %809 = vdwg.mxu0
        %v810 = vadd.f32 %v557, %v781
        %v811 = vadd.f32 %v558, %v807
        %812 = vst [vmem:[#allocation2] sm:$0xff] %v810
        %813 = vst [vmem:[#allocation2 + $0x8] sm:$0xff] %v811
        %v814 = vunpack.c.l.bf16 %v556
        %v815 = vunpack.c.h.bf16 %v556
        %v816 = vld [vmem:[#allocation3] sm:$0xff]
        %v817 = vmul.f32 %v814, %v814
        %v818 = vmul.f32 %v815, %v815
        %v819 = vadd.f32 %v817, %v818
        %820 = vadd.xlane.f32.xlu0 %v819
        %v821 = vpop.xlane.xlu0 %820
        %v822 = vadd.f32 %v816, %v821
        %vm823 = vcmask 7168
        %824 = vst.msk [vmem:[#allocation3] sm:$0xff] %vm823, %v822
        %p825 = scmp.eq.s32.totalorder %s42, 3
        // Predicated region
        $region85: #{tpu_custom_call.1} parent=55 // pred_check
          %p826 = pneg %p825
        $region86: #{tpu_custom_call.1} parent=55 // pred_check_branch
          %828 = sbr.rel (%p826) target = $region88
        $region87: #{tpu_custom_call.1} parent=55 // pred_region
          %v829 = vld [vmem:[#allocation3] sm:$0xff]
          %v830 = vmax.f32 %v829, 1e-24
          %v831 = vrsqrt.pop %v830
          %v832 = vmul.f32 %v831, %v830
          %v833 = vmul.f32 %v832, %v831
          %v834 = vmul.f32 0.5, %v833
          %v835 = vsub.f32 1.5, %v834
          %v836 = vmul.f32 %v831, %v835
          %vm837 = vweird.f32 %v830
          %vm838 = vweird.f32 %v831
          %vm839 = vmor %vm837, %vm838
          %v840 = vsel %vm839, %v831, %v836
          %v841 = vld [vmem:[#allocation2] sm:$0xff]
          %v842 = vld [vmem:[#allocation2 + $0x8] sm:$0xff]
          %844 = vset.pattern.permute.xlu0 0
          %845 = vperm.xlu0 %844, %v840
          %v846 = vpop.permute.xlu0 %845
          %v848 = vmul.f32 %v841, %v846
          %v849 = vmul.f32 %v842, %v846
          %v850 = vld [vmem:[#allocation9] sm:$0x3]
          %v852 = vperm.slane %v850, 0
          %v853 = vperm.slane %v850, 1
          %v856 = vadd.f32 %v848, %v852
          %v857 = vadd.f32 %v849, %v853
          %v858 = vtanh.pop %v856
          %v859 = vtanh.pop %v857
          %v860 = vld [vmem:[#allocation10] sm:$0xf]
          %v861 = vld [vmem:[#allocation10 + $0x4] sm:$0xf]
          %v862 = vld [vmem:[#allocation10 + $0x8] sm:$0xf]
          %v863 = vld [vmem:[#allocation10 + $0xc] sm:$0xf]
          %v864 = vld [vmem:[#allocation10 + $0x10] sm:$0xf]
          %v865 = vld [vmem:[#allocation10 + $0x14] sm:$0xf]
          %v866 = vld [vmem:[#allocation10 + $0x18] sm:$0xf]
          %v867 = vld [vmem:[#allocation10 + $0x1c] sm:$0xf]
          %v868 = vld [vmem:[#allocation10 + $0x20] sm:$0xf]
          %v869 = vld [vmem:[#allocation10 + $0x24] sm:$0xf]
          %v870 = vld [vmem:[#allocation10 + $0x28] sm:$0xf]
          %v871 = vld [vmem:[#allocation10 + $0x2c] sm:$0xf]
          %v872 = vld [vmem:[#allocation10 + $0x30] sm:$0xf]
          %v873 = vld [vmem:[#allocation10 + $0x34] sm:$0xf]
          %v874 = vld [vmem:[#allocation10 + $0x38] sm:$0xf]
          %v875 = vld [vmem:[#allocation10 + $0x3c] sm:$0xf]
          %v876 = vld [vmem:[#allocation10 + $0x40] sm:$0xf]
          %v877 = vld [vmem:[#allocation10 + $0x44] sm:$0xf]
          %v878 = vld [vmem:[#allocation10 + $0x48] sm:$0xf]
          %v879 = vld [vmem:[#allocation10 + $0x4c] sm:$0xf]
          %v880 = vld [vmem:[#allocation10 + $0x50] sm:$0xf]
          %v881 = vld [vmem:[#allocation10 + $0x54] sm:$0xf]
          %v882 = vld [vmem:[#allocation10 + $0x58] sm:$0xf]
          %v883 = vld [vmem:[#allocation10 + $0x5c] sm:$0xf]
          %v884 = vld [vmem:[#allocation10 + $0x60] sm:$0xf]
          %v885 = vld [vmem:[#allocation10 + $0x64] sm:$0xf]
          %v886 = vld [vmem:[#allocation10 + $0x68] sm:$0xf]
          %v887 = vld [vmem:[#allocation10 + $0x6c] sm:$0xf]
          %v888 = vld [vmem:[#allocation10 + $0x70] sm:$0xf]
          %v889 = vld [vmem:[#allocation10 + $0x74] sm:$0xf]
          %v890 = vld [vmem:[#allocation10 + $0x78] sm:$0xf]
          %v891 = vld [vmem:[#allocation10 + $0x7c] sm:$0xf]
          %v892 = vunpack.c.l.bf16 %v860
          %v893 = vunpack.c.l.bf16 %v861
          %v894 = vunpack.c.l.bf16 %v862
          %v895 = vunpack.c.l.bf16 %v863
          %v896 = vunpack.c.l.bf16 %v864
          %v897 = vunpack.c.l.bf16 %v865
          %v898 = vunpack.c.l.bf16 %v866
          %v899 = vunpack.c.l.bf16 %v867
          %v900 = vunpack.c.l.bf16 %v868
          %v901 = vunpack.c.l.bf16 %v869
          %v902 = vunpack.c.l.bf16 %v870
          %v903 = vunpack.c.l.bf16 %v871
          %v904 = vunpack.c.l.bf16 %v872
          %v905 = vunpack.c.l.bf16 %v873
          %v906 = vunpack.c.l.bf16 %v874
          %v907 = vunpack.c.l.bf16 %v875
          %v908 = vunpack.c.l.bf16 %v876
          %v909 = vunpack.c.l.bf16 %v877
          %v910 = vunpack.c.l.bf16 %v878
          %v911 = vunpack.c.l.bf16 %v879
          %v912 = vunpack.c.l.bf16 %v880
          %v913 = vunpack.c.l.bf16 %v881
          %v914 = vunpack.c.l.bf16 %v882
          %v915 = vunpack.c.l.bf16 %v883
          %v916 = vunpack.c.l.bf16 %v884
          %v917 = vunpack.c.l.bf16 %v885
          %v918 = vunpack.c.l.bf16 %v886
          %v919 = vunpack.c.l.bf16 %v887
          %v920 = vunpack.c.l.bf16 %v888
          %v921 = vunpack.c.l.bf16 %v889
          %v922 = vunpack.c.l.bf16 %v890
          %v923 = vunpack.c.l.bf16 %v891
          %v924 = vld [vmem:[%s4] sm:$0x1]
          %v926 = vperm.slane %v924, 0
          %928 = vmatpush.msra.mxu0 %v907
          %929 = vmatpush.msra.mxu0 %v906
          %930 = vmatpush.msra.mxu0 %v905
          %931 = vmatpush.msra.mxu0 %v904
          %932 = vmatpush.msra.mxu0 %v903
          %933 = vmatpush.msra.mxu0 %v902
          %934 = vmatpush.msra.mxu0 %v901
          %935 = vmatpush.msra.mxu0 %v900
          %936 = vmatpush.msra.mxu0 %v899
          %937 = vmatpush.msra.mxu0 %v898
          %938 = vmatpush.msra.mxu0 %v897
          %939 = vmatpush.msra.mxu0 %v896
          %940 = vmatpush.msra.mxu0 %v895
          %941 = vmatpush.msra.mxu0 %v894
          %942 = vmatpush.msra.mxu0 %v893
          %943 = vmatpush.msra.mxu0 %v892
          %944 = vmatmul.f32.gmra.mxu0 %v858
          %v945 = vpop.f32.mrf.mxu0
          %v946 = vadd.f32 %v926, %v945
          %947 = vdwg.mxu0
          %948 = vmatpush.msra.mxu0 %v923
          %949 = vmatpush.msra.mxu0 %v922
          %950 = vmatpush.msra.mxu0 %v921
          %951 = vmatpush.msra.mxu0 %v920
          %952 = vmatpush.msra.mxu0 %v919
          %953 = vmatpush.msra.mxu0 %v918
          %954 = vmatpush.msra.mxu0 %v917
          %955 = vmatpush.msra.mxu0 %v916
          %956 = vmatpush.msra.mxu0 %v915
          %957 = vmatpush.msra.mxu0 %v914
          %958 = vmatpush.msra.mxu0 %v913
          %959 = vmatpush.msra.mxu0 %v912
          %960 = vmatpush.msra.mxu0 %v911
          %961 = vmatpush.msra.mxu0 %v910
          %962 = vmatpush.msra.mxu0 %v909
          %963 = vmatpush.msra.mxu0 %v908
          %964 = vmatmul.f32.gmra.mxu0 %v859
          %v965 = vpop.f32.mrf.mxu0
          %v966 = vadd.f32 %v946, %v965
          %967 = vdwg.mxu0
          %v968 = vld [vmem:[#allocation12] sm:$0xf]
          %v969 = vld [vmem:[#allocation12 + $0x4] sm:$0xf]
          %v970 = vld [vmem:[#allocation12 + $0x8] sm:$0xf]
          %v971 = vld [vmem:[#allocation12 + $0xc] sm:$0xf]
          %v972 = vld [vmem:[#allocation12 + $0x10] sm:$0xf]
          %v973 = vld [vmem:[#allocation12 + $0x14] sm:$0xf]
          %v974 = vld [vmem:[#allocation12 + $0x18] sm:$0xf]
          %v975 = vld [vmem:[#allocation12 + $0x1c] sm:$0xf]
          %v976 = vld [vmem:[#allocation12 + $0x20] sm:$0xf]
          %v977 = vld [vmem:[#allocation12 + $0x24] sm:$0xf]
          %v978 = vld [vmem:[#allocation12 + $0x28] sm:$0xf]
          %v979 = vld [vmem:[#allocation12 + $0x2c] sm:$0xf]
          %v980 = vld [vmem:[#allocation12 + $0x30] sm:$0xf]
          %v981 = vld [vmem:[#allocation12 + $0x34] sm:$0xf]
          %v982 = vld [vmem:[#allocation12 + $0x38] sm:$0xf]
          %v983 = vld [vmem:[#allocation12 + $0x3c] sm:$0xf]
          %v984 = vld [vmem:[#allocation12 + $0x40] sm:$0xf]
          %v985 = vld [vmem:[#allocation12 + $0x44] sm:$0xf]
          %v986 = vld [vmem:[#allocation12 + $0x48] sm:$0xf]
          %v987 = vld [vmem:[#allocation12 + $0x4c] sm:$0xf]
          %v988 = vld [vmem:[#allocation12 + $0x50] sm:$0xf]
          %v989 = vld [vmem:[#allocation12 + $0x54] sm:$0xf]
          %v990 = vld [vmem:[#allocation12 + $0x58] sm:$0xf]
          %v991 = vld [vmem:[#allocation12 + $0x5c] sm:$0xf]
          %v992 = vld [vmem:[#allocation12 + $0x60] sm:$0xf]
          %v993 = vld [vmem:[#allocation12 + $0x64] sm:$0xf]
          %v994 = vld [vmem:[#allocation12 + $0x68] sm:$0xf]
          %v995 = vld [vmem:[#allocation12 + $0x6c] sm:$0xf]
          %v996 = vld [vmem:[#allocation12 + $0x70] sm:$0xf]
          %v997 = vld [vmem:[#allocation12 + $0x74] sm:$0xf]
          %v998 = vld [vmem:[#allocation12 + $0x78] sm:$0xf]
          %v999 = vld [vmem:[#allocation12 + $0x7c] sm:$0xf]
          %v1000 = vunpack.c.l.bf16 %v968
          %v1001 = vunpack.c.l.bf16 %v969
          %v1002 = vunpack.c.l.bf16 %v970
          %v1003 = vunpack.c.l.bf16 %v971
          %v1004 = vunpack.c.l.bf16 %v972
          %v1005 = vunpack.c.l.bf16 %v973
          %v1006 = vunpack.c.l.bf16 %v974
          %v1007 = vunpack.c.l.bf16 %v975
          %v1008 = vunpack.c.l.bf16 %v976
          %v1009 = vunpack.c.l.bf16 %v977
          %v1010 = vunpack.c.l.bf16 %v978
          %v1011 = vunpack.c.l.bf16 %v979
          %v1012 = vunpack.c.l.bf16 %v980
          %v1013 = vunpack.c.l.bf16 %v981
          %v1014 = vunpack.c.l.bf16 %v982
          %v1015 = vunpack.c.l.bf16 %v983
          %v1016 = vunpack.c.l.bf16 %v984
          %v1017 = vunpack.c.l.bf16 %v985
          %v1018 = vunpack.c.l.bf16 %v986
          %v1019 = vunpack.c.l.bf16 %v987
          %v1020 = vunpack.c.l.bf16 %v988
          %v1021 = vunpack.c.l.bf16 %v989
          %v1022 = vunpack.c.l.bf16 %v990
          %v1023 = vunpack.c.l.bf16 %v991
          %v1024 = vunpack.c.l.bf16 %v992
          %v1025 = vunpack.c.l.bf16 %v993
          %v1026 = vunpack.c.l.bf16 %v994
          %v1027 = vunpack.c.l.bf16 %v995
          %v1028 = vunpack.c.l.bf16 %v996
          %v1029 = vunpack.c.l.bf16 %v997
          %v1030 = vunpack.c.l.bf16 %v998
          %v1031 = vunpack.c.l.bf16 %v999
          %v1032 = vld [vmem:[%s6] sm:$0x1]
          %v1034 = vperm.slane %v1032, 0
          %1036 = vmatpush.msra.mxu0 %v1015
          %1037 = vmatpush.msra.mxu0 %v1014
          %1038 = vmatpush.msra.mxu0 %v1013
          %1039 = vmatpush.msra.mxu0 %v1012
          %1040 = vmatpush.msra.mxu0 %v1011
          %1041 = vmatpush.msra.mxu0 %v1010
          %1042 = vmatpush.msra.mxu0 %v1009
          %1043 = vmatpush.msra.mxu0 %v1008
          %1044 = vmatpush.msra.mxu0 %v1007
          %1045 = vmatpush.msra.mxu0 %v1006
          %1046 = vmatpush.msra.mxu0 %v1005
          %1047 = vmatpush.msra.mxu0 %v1004
          %1048 = vmatpush.msra.mxu0 %v1003
          %1049 = vmatpush.msra.mxu0 %v1002
          %1050 = vmatpush.msra.mxu0 %v1001
          %1051 = vmatpush.msra.mxu0 %v1000
          %1052 = vmatmul.f32.gmra.mxu0 %v858
          %v1053 = vpop.f32.mrf.mxu0
          %v1054 = vadd.f32 %v1034, %v1053
          %1055 = vdwg.mxu0
          %1056 = vmatpush.msra.mxu0 %v1031
          %1057 = vmatpush.msra.mxu0 %v1030
          %1058 = vmatpush.msra.mxu0 %v1029
          %1059 = vmatpush.msra.mxu0 %v1028
          %1060 = vmatpush.msra.mxu0 %v1027
          %1061 = vmatpush.msra.mxu0 %v1026
          %1062 = vmatpush.msra.mxu0 %v1025
          %1063 = vmatpush.msra.mxu0 %v1024
          %1064 = vmatpush.msra.mxu0 %v1023
          %1065 = vmatpush.msra.mxu0 %v1022
          %1066 = vmatpush.msra.mxu0 %v1021
          %1067 = vmatpush.msra.mxu0 %v1020
          %1068 = vmatpush.msra.mxu0 %v1019
          %1069 = vmatpush.msra.mxu0 %v1018
          %1070 = vmatpush.msra.mxu0 %v1017
          %1071 = vmatpush.msra.mxu0 %v1016
          %1072 = vmatmul.f32.gmra.mxu0 %v859
          %v1073 = vpop.f32.mrf.mxu0
          %v1074 = vadd.f32 %v1054, %v1073
          %1075 = vdwg.mxu0
          %1076 = vst [vmem:[%s531] sm:$0xff] %v966
          %1077 = vst [vmem:[%s538] sm:$0xff] %v1074
          %v1078 = vld [vmem:[#allocation13] sm:$0xff]
          %v1079 = vld [vmem:[#allocation13 + $0x8] sm:$0xff]
          %v1080 = vld [vmem:[#allocation13 + $0x10] sm:$0xff]
          %v1081 = vld [vmem:[#allocation13 + $0x18] sm:$0xff]
          %v1082 = vld [vmem:[#allocation13 + $0x20] sm:$0xff]
          %v1083 = vld [vmem:[#allocation13 + $0x28] sm:$0xff]
          %v1084 = vld [vmem:[#allocation13 + $0x30] sm:$0xff]
          %v1085 = vld [vmem:[#allocation13 + $0x38] sm:$0xff]
          %v1086 = vld [vmem:[#allocation13 + $0x40] sm:$0xff]
          %v1087 = vld [vmem:[#allocation13 + $0x48] sm:$0xff]
          %v1088 = vld [vmem:[#allocation13 + $0x50] sm:$0xff]
          %v1089 = vld [vmem:[#allocation13 + $0x58] sm:$0xff]
          %v1090 = vld [vmem:[#allocation13 + $0x60] sm:$0xff]
          %v1091 = vld [vmem:[#allocation13 + $0x68] sm:$0xff]
          %v1092 = vld [vmem:[#allocation13 + $0x70] sm:$0xff]
          %v1093 = vld [vmem:[#allocation13 + $0x78] sm:$0xff]
          %v1094 = vunpack.c.l.bf16 %v1078
          %v1095 = vunpack.c.h.bf16 %v1078
          %v1096 = vunpack.c.l.bf16 %v1079
          %v1097 = vunpack.c.h.bf16 %v1079
          %v1098 = vunpack.c.l.bf16 %v1080
          %v1099 = vunpack.c.h.bf16 %v1080
          %v1100 = vunpack.c.l.bf16 %v1081
          %v1101 = vunpack.c.h.bf16 %v1081
          %v1102 = vunpack.c.l.bf16 %v1082
          %v1103 = vunpack.c.h.bf16 %v1082
          %v1104 = vunpack.c.l.bf16 %v1083
          %v1105 = vunpack.c.h.bf16 %v1083
          %v1106 = vunpack.c.l.bf16 %v1084
          %v1107 = vunpack.c.h.bf16 %v1084
          %v1108 = vunpack.c.l.bf16 %v1085
          %v1109 = vunpack.c.h.bf16 %v1085
          %v1110 = vunpack.c.l.bf16 %v1086
          %v1111 = vunpack.c.h.bf16 %v1086
          %v1112 = vunpack.c.l.bf16 %v1087
          %v1113 = vunpack.c.h.bf16 %v1087
          %v1114 = vunpack.c.l.bf16 %v1088
          %v1115 = vunpack.c.h.bf16 %v1088
          %v1116 = vunpack.c.l.bf16 %v1089
          %v1117 = vunpack.c.h.bf16 %v1089
          %v1118 = vunpack.c.l.bf16 %v1090
          %v1119 = vunpack.c.h.bf16 %v1090
          %v1120 = vunpack.c.l.bf16 %v1091
          %v1121 = vunpack.c.h.bf16 %v1091
          %v1122 = vunpack.c.l.bf16 %v1092
          %v1123 = vunpack.c.h.bf16 %v1092
          %v1124 = vunpack.c.l.bf16 %v1093
          %v1125 = vunpack.c.h.bf16 %v1093
          %v1126 = vld [vmem:[%s8] sm:$0x3]
          %v1128 = vperm.slane %v1126, 0
          %v1129 = vperm.slane %v1126, 1
          %1132 = vmatpush.msra.mxu0 %v1124
          %1133 = vmatpush.msra.mxu0 %v1122
          %1134 = vmatpush.msra.mxu0 %v1120
          %1135 = vmatpush.msra.mxu0 %v1118
          %1136 = vmatpush.msra.mxu0 %v1116
          %1137 = vmatpush.msra.mxu0 %v1114
          %1138 = vmatpush.msra.mxu0 %v1112
          %1139 = vmatpush.msra.mxu0 %v1110
          %1140 = vmatpush.msra.mxu0 %v1108
          %1141 = vmatpush.msra.mxu0 %v1106
          %1142 = vmatpush.msra.mxu0 %v1104
          %1143 = vmatpush.msra.mxu0 %v1102
          %1144 = vmatpush.msra.mxu0 %v1100
          %1145 = vmatpush.msra.mxu0 %v1098
          %1146 = vmatpush.msra.mxu0 %v1096
          %1147 = vmatpush.msra.mxu0 %v1094
          %1148 = vmatmul.f32.gmra.mxu0 %v966
          %v1149 = vpop.f32.mrf.mxu0
          %v1150 = vadd.f32 %v1128, %v1149
          %1151 = vdwg.mxu0
          %1152 = vmatpush.msra.mxu0 %v1125
          %1153 = vmatpush.msra.mxu0 %v1123
          %1154 = vmatpush.msra.mxu0 %v1121
          %1155 = vmatpush.msra.mxu0 %v1119
          %1156 = vmatpush.msra.mxu0 %v1117
          %1157 = vmatpush.msra.mxu0 %v1115
          %1158 = vmatpush.msra.mxu0 %v1113
          %1159 = vmatpush.msra.mxu0 %v1111
          %1160 = vmatpush.msra.mxu0 %v1109
          %1161 = vmatpush.msra.mxu0 %v1107
          %1162 = vmatpush.msra.mxu0 %v1105
          %1163 = vmatpush.msra.mxu0 %v1103
          %1164 = vmatpush.msra.mxu0 %v1101
          %1165 = vmatpush.msra.mxu0 %v1099
          %1166 = vmatpush.msra.mxu0 %v1097
          %1167 = vmatpush.msra.mxu0 %v1095
          %1168 = vmatmul.f32.gmra.mxu0 %v966
          %v1169 = vpop.f32.mrf.mxu0
          %v1170 = vadd.f32 %v1129, %v1169
          %1171 = vdwg.mxu0
          %v1172 = vtanh.pop %v1150
          %v1173 = vtanh.pop %v1170
          %v1174 = vpack.c.bf16 %v1173, %v1172
          %1175 = vst [vmem:[%s545] sm:$0xff] %v1174
        $region88: #{tpu_custom_call.1} parent=55 // pred_fallthru
          _
        %s1176 = sand.u32 %s258, 1
        %s1177 = scalar_lea.sflag [#allocation6], %s1176
        %s1178 = sand.u32 %s258, 1
        %s1179 = smul.addr %s1178, 8
        %s1180 = scalar_lea.vmem [#allocation15], %s1179
        %s1181 = sand.u32 %s37, 1
        %s1182 = scalar_lea.sflag [#allocation17], %s1181
        %s1183 = sand.u32 %s284, 1
        %s1184 = smul.addr %s1183, 8
        %s1185 = scalar_lea.vmem [#allocation16], %s1184
        %s1186 = sand.u32 %s37, 1
        %s1187 = scalar_lea.sflag [#allocation17], %s1186
        %s1188 = sand.u32 %s310, 1
        %s1189 = smul.addr %s1188, 8
        %s1190 = scalar_lea.vmem [#allocation18], %s1189
        // Predicated region
        $region89: #{tpu_custom_call.1} parent=55 // pred_check
          %p1191 = pneg %p268
        $region90: #{tpu_custom_call.1} parent=55 // pred_check_branch
          %1193 = sbr.rel (%p1191) target = $region92
        $region91: #{tpu_custom_call.1} parent=55 // pred_region
          %1195 = vsyncadd %s1177, 0
          %s1196 = smul.addr %s41, 8
          %s1197 = scalar_lea.hbm %s9, %s1196
          %s1199 = sshll.u32 %s1180, 4
          %s1200 = int_to_ptr.vmem [resolvable:$true] %s1199
          %s1201 = sshll.u32 %s1197, 4
          %s1202 = int_to_ptr.hbm [resolvable:$true] %s1201
          %1204 = dma.vmem_to_hbm [thread:$0]  %s1200, 128, %s1202, %s1177
        $region92: #{tpu_custom_call.1} parent=55 // pred_fallthru
          _
        // Predicated region
        $region93: #{tpu_custom_call.1} parent=55 // pred_check
          %p1205 = pneg %p294
        $region94: #{tpu_custom_call.1} parent=55 // pred_check_branch
          %1207 = sbr.rel (%p1205) target = $region96
        $region95: #{tpu_custom_call.1} parent=55 // pred_region
          %1209 = vsyncadd %s1182, 0
          %s1210 = smul.addr %s41, 8
          %s1211 = scalar_lea.hbm %s10, %s1210
          %s1213 = sshll.u32 %s1185, 4
          %s1214 = int_to_ptr.vmem [resolvable:$true] %s1213
          %s1215 = sshll.u32 %s1211, 4
          %s1216 = int_to_ptr.hbm [resolvable:$true] %s1215
          %1218 = dma.vmem_to_hbm [thread:$0]  %s1214, 128, %s1216, %s1182
        $region96: #{tpu_custom_call.1} parent=55 // pred_fallthru
          _
        // Predicated region
        $region97: #{tpu_custom_call.1} parent=55 // pred_check
          %p1219 = pneg %p320
        $region98: #{tpu_custom_call.1} parent=55 // pred_check_branch
          %1221 = sbr.rel (%p1219) target = $region100
        $region99: #{tpu_custom_call.1} parent=55 // pred_region
          %1223 = vsyncadd %s1187, 0
          %s1224 = smul.addr %s41, 2
          %s1225 = smul.addr %s1224, 4
          %s1226 = scalar_lea.hbm %s11, %s1225
          %s1228 = sshll.u32 %s1190, 4
          %s1229 = int_to_ptr.vmem [resolvable:$true] %s1228
          %s1230 = sshll.u32 %s1226, 4
          %s1231 = int_to_ptr.hbm [resolvable:$true] %s1230
          %1233 = dma.vmem_to_hbm [thread:$0]  %s1229, 128, %s1231, %s1187
        $region100: #{tpu_custom_call.1} parent=55 // pred_fallthru
          _
      $region56: #{tpu_custom_call.1} parent=5 // pred_fallthru
        _
      %p1234 = scmp.le.s32.totalorder 2, %s32
      // Predicated region
      $region101: #{tpu_custom_call.1} parent=5 // pred_check
        %p1235 = pneg %p1234
      $region102: #{tpu_custom_call.1} parent=5 // pred_check_branch
        %1237 = sbr.rel (%p1235) target = $region104
      $region103: #{tpu_custom_call.1} parent=5 // pred_region
        %s1238 = ssub.s32 %s32, 2
        // Predicated region
        $region105: #{tpu_custom_call.1} parent=103 // pred_check
          %p1239 = pneg %p274
        $region106: #{tpu_custom_call.1} parent=103 // pred_check_branch
          %1241 = sbr.rel (%p1239) target = $region108
        $region107: #{tpu_custom_call.1} parent=103 // pred_region
          %s1242 = sand.u32 %s259, 1
          %s1243 = scalar_lea.sflag [#allocation6], %s1242
          %s1244 = sand.u32 %s259, 1
          %s1245 = smul.addr %s1244, 8
          %s1246 = scalar_lea.vmem [#allocation15], %s1245
          %1248 = dma.done %s1243, 128
        $region108: #{tpu_custom_call.1} parent=103 // pred_fallthru
          _
        // Predicated region
        $region109: #{tpu_custom_call.1} parent=103 // pred_check
          %p1249 = pneg %p300
        $region110: #{tpu_custom_call.1} parent=103 // pred_check_branch
          %1251 = sbr.rel (%p1249) target = $region112
        $region111: #{tpu_custom_call.1} parent=103 // pred_region
          %s1252 = sand.u32 %s38, 1
          %s1253 = scalar_lea.sflag [#allocation17], %s1252
          %s1254 = sand.u32 %s285, 1
          %s1255 = smul.addr %s1254, 8
          %s1256 = scalar_lea.vmem [#allocation16], %s1255
          %1258 = dma.done %s1253, 128
        $region112: #{tpu_custom_call.1} parent=103 // pred_fallthru
          _
        // Predicated region
        $region113: #{tpu_custom_call.1} parent=103 // pred_check
          %p1259 = pneg %p326
        $region114: #{tpu_custom_call.1} parent=103 // pred_check_branch
          %1261 = sbr.rel (%p1259) target = $region116
        $region115: #{tpu_custom_call.1} parent=103 // pred_region
          %s1262 = sand.u32 %s38, 1
          %s1263 = scalar_lea.sflag [#allocation17], %s1262
          %s1264 = sand.u32 %s311, 1
          %s1265 = smul.addr %s1264, 8
          %s1266 = scalar_lea.vmem [#allocation18], %s1265
          %1268 = dma.done %s1263, 128
        $region116: #{tpu_custom_call.1} parent=103 // pred_fallthru
          _
      $region104: #{tpu_custom_call.1} parent=5 // pred_fallthru
        _
    $region6: #{tpu_custom_call.1} parent=1 // loop_footer
      %s36 = sadd.s32 1, %s32
    $region7: #{tpu_custom_call.1} parent=1 // loop_footer_branch
      %31 = sbr.rel target = $region3
    $region8: #{tpu_custom_call.1} parent=1 // loop_exit
      _
    %1269 = vsyncpa [#allocation5], 1
    %s1270 = scalar_lea.sflag [#allocation5], 1
    %1271 = vsyncpa %s1270, 1
    %1272 = vsyncpa [#allocation8], 1
    %s1273 = scalar_lea.sflag [#allocation8], 1
    %1274 = vsyncpa %s1273, 1
    %1275 = vsyncpa [#allocation11], 1
    %1276 = vsyncpa [#allocation14], 1
    %1277 = vsyncpa [#allocation6], 1
    %s1278 = scalar_lea.sflag [#allocation6], 1
    %1279 = vsyncpa %s1278, 1
    %1280 = vsyncpa [#allocation17], 1
    %s1281 = scalar_lea.sflag [#allocation17], 1
    %1282 = vsyncpa %s1281, 1

</llo_original>
